<compile_context>
chip_gen: v5e
topology: v5e:2x2
jax: 0.10.0
libtpu: 0.0.40
codegen_flags: <defaults>
</compile_context>

<pallas_src>
import math

import jax
import jax.numpy as jnp
from jax.experimental import pallas as pl
from jax.experimental.pallas import tpu as pltpu

# ----------------------------- config ---------------------------------------
VOCAB = 128
HIDDEN = 32
NUM_LAYERS = 2
NUM_HEADS = 2
HEAD_DIM = HIDDEN // NUM_HEADS
INTERMEDIATE = 64
MAX_POS = 16
TYPE_VOCAB = 2
LN_EPS = 1e-12

_NUM_LVEC_ROWS = 8  # packed per-layer small vectors (see _pack_layer_vectors)


# ----------------------------- in-kernel helpers -----------------------------
def _layer_norm(h, g, b):
    """LayerNorm over the last dim (f32 statistics)."""
    mu = jnp.mean(h, axis=-1, keepdims=True)
    var = jnp.mean((h - mu) * (h - mu), axis=-1, keepdims=True)
    return (h - mu) * jax.lax.rsqrt(var + LN_EPS) * g + b


# ----------------------------- fused encoder kernel --------------------------
def encoder_kernel(emb_ref, bias_ref, emb_g_ref, emb_b_ref,
                   wqkv_ref, lvec_ref, wo_ref, wi_ref, wo2_ref,
                   pw_ref, pb_ref, out_ref):
    """One grid step == full encoder forward for one batch row (no scratch)."""
    H, NH, HD, I = HIDDEN, NUM_HEADS, HEAD_DIM, INTERMEDIATE
    scale = 1.0 / math.sqrt(HD)
    bf16 = jnp.bfloat16

    # ---- embedding LayerNorm ------------------------------------------------
    h = _layer_norm(emb_ref[0], emb_g_ref[...], emb_b_ref[...])      # (S, H) f32
    bias = bias_ref[0]                                               # (1, S) f32

    for l in range(NUM_LAYERS):                                      # static unroll, L=2
        # ---- packed per-layer vectors: direct row-window loads --------------
        b_qkv = lvec_ref[l, 0:1, :3 * H]
        b_o = lvec_ref[l, 1:2, :H]
        aln_g = lvec_ref[l, 2:3, :H]
        aln_b = lvec_ref[l, 3:4, :H]
        b_i = lvec_ref[l, 4:5, :I]
        b_o2 = lvec_ref[l, 5:6, :H]
        fln_g = lvec_ref[l, 6:7, :H]
        fln_b = lvec_ref[l, 7:8, :H]

        # ---- fused QKV projection: single (S,H)x(H,3H) MXU matmul -----------
        qkv = jnp.dot(h.astype(bf16), wqkv_ref[l],
                      preferred_element_type=jnp.float32) + b_qkv    # (S, 3H) f32

        # ---- head-batched attention (single dot_generals over the NH axis) --
        q = jnp.stack([qkv[:, n * HD:(n + 1) * HD]
                       for n in range(NH)], axis=0)                  # (NH, S, HD)
        k = jnp.stack([qkv[:, H + n * HD:H + (n + 1) * HD]
                       for n in range(NH)], axis=0)
        v = jnp.stack([qkv[:, 2 * H + n * HD:2 * H + (n + 1) * HD]
                       for n in range(NH)], axis=0)

        scores = jax.lax.dot_general(
            q.astype(bf16), k.astype(bf16),
            (((2,), (2,)), ((0,), (0,))),
            preferred_element_type=jnp.float32) * scale + bias       # (NH, S, S)

        m = jnp.max(scores, axis=-1, keepdims=True)                  # batched softmax
        e = jnp.exp(scores - m)
        p = e / jnp.sum(e, axis=-1, keepdims=True)                   # exact divide, f32

        ctx = jax.lax.dot_general(
            p.astype(bf16), v.astype(bf16),
            (((2,), (1,)), ((0,), (0,))),
            preferred_element_type=jnp.float32)                      # (NH, S, HD)

        # fold head-merge + output projection: (NH,S,HD)@(NH,HD,H) then sum heads
        attn = jax.lax.dot_general(
            ctx.astype(bf16), wo_ref[l],
            (((2,), (1,)), ((0,), (0,))),
            preferred_element_type=jnp.float32)                      # (NH, S, H)
        attn = jnp.sum(attn, axis=0) + b_o                           # (S, H)

        # ---- residual + LayerNorm (attention) -------------------------------
        h = _layer_norm(attn + h, aln_g, aln_b)

        # ---- feed-forward ----------------------------------------------------
        # TODO(synk): HF BERT uses exact erf GELU; tanh approximation used here.
        inter = jax.nn.gelu(
            jnp.dot(h.astype(bf16), wi_ref[l],
                    preferred_element_type=jnp.float32) + b_i,
            approximate=True)
        ffn = jnp.dot(inter.astype(bf16), wo2_ref[l],
                      preferred_element_type=jnp.float32) + b_o2
        h = _layer_norm(ffn + h, fln_g, fln_b)

    # ---- pooler: CLS is row 0 of this batch row's activations ----------------
    cls = h[0:1, :]                                                  # (1, H) f32
    pooled = jnp.tanh(
        jnp.dot(cls.astype(bf16), pw_ref[...],
                preferred_element_type=jnp.float32) + pb_ref[...])   # (1, H) f32
    out_ref[...] = pooled.reshape(1, 1, H)


# ----------------------------- parameters ------------------------------------
def init_params(key):
    keys = iter(jax.random.split(key, 8))

    def n(shape):
        return 0.02 * jax.random.normal(next(keys), shape, dtype=jnp.float32)

    L, H, I = NUM_LAYERS, HIDDEN, INTERMEDIATE
    return {
        "word_emb": n((VOCAB, H)),
        "pos_emb": n((MAX_POS, H)),
        "type_emb": n((TYPE_VOCAB, H)),
        "emb_ln_g": jnp.ones((1, H), jnp.float32),
        "emb_ln_b": jnp.zeros((1, H), jnp.float32),
        # stacked per-layer weights; matmul weights stored bf16 (autocast analog)
        "wqkv": n((L, H, 3 * H)).astype(jnp.bfloat16),
        "bqkv": jnp.zeros((L, 1, 3 * H), jnp.float32),
        "wo": n((L, H, H)).astype(jnp.bfloat16),
        "bo": jnp.zeros((L, 1, H), jnp.float32),
        "attn_ln_g": jnp.ones((L, 1, H), jnp.float32),
        "attn_ln_b": jnp.zeros((L, 1, H), jnp.float32),
        "wi": n((L, H, I)).astype(jnp.bfloat16),
        "bi": jnp.zeros((L, 1, I), jnp.float32),
        "wo2": n((L, I, H)).astype(jnp.bfloat16),
        "bo2": jnp.zeros((L, 1, H), jnp.float32),
        "ffn_ln_g": jnp.ones((L, 1, H), jnp.float32),
        "ffn_ln_b": jnp.zeros((L, 1, H), jnp.float32),
        "pooler_w": n((H, H)).astype(jnp.bfloat16),
        "pooler_b": jnp.zeros((1, H), jnp.float32),
    }


def _pack_layer_vectors(params):
    """Pack the 8 tiny per-layer vectors into one [L, 8, 3H] f32 slab (1 DMA)."""
    W = 3 * HIDDEN

    def row(x):
        return jnp.pad(x.astype(jnp.float32),
                       ((0, 0), (0, 0), (0, W - x.shape[-1])))

    return jnp.concatenate(
        [row(params["bqkv"]), row(params["bo"]),
         row(params["attn_ln_g"]), row(params["attn_ln_b"]),
         row(params["bi"]), row(params["bo2"]),
         row(params["ffn_ln_g"]), row(params["ffn_ln_b"])], axis=1)


# ----------------------------- forward ---------------------------------------
def encoder_forward(params, input_ids, attention_mask=None, token_type_ids=None):
    b, s = input_ids.shape
    H, I, L = HIDDEN, INTERMEDIATE, NUM_LAYERS
    NH, HD = NUM_HEADS, HEAD_DIM
    if attention_mask is None:
        attention_mask = jnp.ones((b, s), jnp.float32)
    if token_type_ids is None:
        token_type_ids = jnp.zeros((b, s), jnp.int32)

    # --- embedding gather (glue; everything else is one fused Pallas call) ---
    emb = (jnp.take(params["word_emb"], input_ids, axis=0)
           + params["pos_emb"][:s][None, :, :]
           + jnp.take(params["type_emb"], token_type_ids, axis=0)
           ).astype(jnp.float32)                                    # (B, S, H)

    # additive attention mask, precomputed ONCE (hoisted out of the kernel loop)
    attn_bias = ((attention_mask.astype(jnp.float32) - 1.0) * 1e9).reshape(b, 1, s)

    lvec = _pack_layer_vectors(params)                               # (L, 8, 3H)
    wo_heads = params["wo"].reshape(L, NH, HD, H)                    # per-head Wo rows

    def _full(shape):                                                # VMEM-resident block
        nd = len(shape)
        return pl.BlockSpec(shape, lambda i, _nd=nd: (0,) * _nd)

    def _per_batch(shape):                                           # one block per batch row
        nd = len(shape)
        return pl.BlockSpec((1,) + shape[1:],
                            lambda i, _nd=nd: (i,) + (0,) * (_nd - 1))

    grid_spec = pltpu.PrefetchScalarGridSpec(
        num_scalar_prefetch=0,
        grid=(b,),
        in_specs=[
            _per_batch((b, s, H)),                 # emb
            _per_batch((b, 1, s)),                 # additive attention bias
            _full((1, H)),                         # emb_ln_g
            _full((1, H)),                         # emb_ln_b
            _full((L, H, 3 * H)),                  # wqkv (fused QKV weight)
            _full((L, _NUM_LVEC_ROWS, 3 * H)),     # packed per-layer vectors
            _full((L, NH, HD, H)),                 # wo, head-major rows
            _full((L, H, I)),                      # wi
            _full((L, I, H)),                      # wo2
            _full((H, H)),                         # pooler_w
            _full((1, H)),                         # pooler_b
        ],
        out_specs=_per_batch((b, 1, H)),
    )

    pooled = pl.pallas_call(
        encoder_kernel,
        out_shape=jax.ShapeDtypeStruct((b, 1, H), jnp.float32),
        grid_spec=grid_spec,
        compiler_params=pltpu.CompilerParams(
            # batch axis: sharded across the two TensorCores on v7x; a cheap
            # 2-step loop on single-core v5e/v6e.
            dimension_semantics=("parallel",)),
    )(emb, attn_bias, params["emb_ln_g"], params["emb_ln_b"],
      params["wqkv"], lvec, wo_heads, params["wi"], params["wo2"],
      params["pooler_w"], params["pooler_b"])
    return pooled.reshape(b, H)


# TODO(synk): dropout is omitted (eval-mode no-op); pretrained-checkpoint
# loading from AutoModel.from_pretrained has no in-script equivalent.

if __name__ == "__main__":
    B, S = 2, 8
    root = jax.random.PRNGKey(0)
    k_params, k_ids = jax.random.split(root)

    params = init_params(k_params)
    input_ids = jax.random.randint(k_ids, (B, S), 0, VOCAB, dtype=jnp.int32)
    attention_mask = jnp.ones((B, S), jnp.float32).at[1, 6:].set(0.0)
    token_type_ids = jnp.zeros((B, S), jnp.int32)

    fwd = jax.jit(encoder_forward)
    out = fwd(params, input_ids, attention_mask, token_type_ids)
    out = jax.block_until_ready(out)

    assert out.shape == (B, HIDDEN), out.shape
    assert out.dtype == jnp.float32
    assert bool(jnp.all(jnp.isfinite(out)))
    print("KERNEL_OK")
</pallas_src>

<mosaic_0001>
module attributes {stable_mosaic.version = 11 : i64} {
  func.func @encoder_kernel(%arg0: i32, %arg1: memref<1x8x32xf32, #tpu.memory_space<vmem>>, %arg2: memref<1x1x8xf32, #tpu.memory_space<vmem>>, %arg3: memref<1x32xf32, #tpu.memory_space<vmem>>, %arg4: memref<1x32xf32, #tpu.memory_space<vmem>>, %arg5: memref<2x32x96xbf16, #tpu.memory_space<vmem>>, %arg6: memref<2x8x96xf32, #tpu.memory_space<vmem>>, %arg7: memref<2x2x16x32xbf16, #tpu.memory_space<vmem>>, %arg8: memref<2x32x64xbf16, #tpu.memory_space<vmem>>, %arg9: memref<2x64x32xbf16, #tpu.memory_space<vmem>>, %arg10: memref<32x32xbf16, #tpu.memory_space<vmem>>, %arg11: memref<1x32xf32, #tpu.memory_space<vmem>>, %arg12: memref<1x1x32xf32, #tpu.memory_space<vmem>>) attributes {dimension_semantics = [#tpu.dimension_semantics<parallel>], iteration_bounds = array<i64: 2>, scalar_prefetch = 0 : i64, scratch_operands = 0 : i64, tpu.core_type = #tpu.core_type<tc>, window_params = [{transform_indices = @transform_0, window_bounds = array<i64: 1, 8, 32>}, {transform_indices = @transform_1, window_bounds = array<i64: 1, 1, 8>}, {pipeline_mode = #tpu.pipeline_mode<synchronous>, transform_indices = @transform_2, window_bounds = array<i64: 1, 32>}, {pipeline_mode = #tpu.pipeline_mode<synchronous>, transform_indices = @transform_3, window_bounds = array<i64: 1, 32>}, {pipeline_mode = #tpu.pipeline_mode<synchronous>, transform_indices = @transform_4, window_bounds = array<i64: 2, 32, 96>}, {pipeline_mode = #tpu.pipeline_mode<synchronous>, transform_indices = @transform_5, window_bounds = array<i64: 2, 8, 96>}, {pipeline_mode = #tpu.pipeline_mode<synchronous>, transform_indices = @transform_6, window_bounds = array<i64: 2, 2, 16, 32>}, {pipeline_mode = #tpu.pipeline_mode<synchronous>, transform_indices = @transform_7, window_bounds = array<i64: 2, 32, 64>}, {pipeline_mode = #tpu.pipeline_mode<synchronous>, transform_indices = @transform_8, window_bounds = array<i64: 2, 64, 32>}, {pipeline_mode = #tpu.pipeline_mode<synchronous>, transform_indices = @transform_9, window_bounds = array<i64: 32, 32>}, {pipeline_mode = #tpu.pipeline_mode<synchronous>, transform_indices = @transform_10, window_bounds = array<i64: 1, 32>}, {transform_indices = @transform_11, window_bounds = array<i64: 1, 1, 32>}]} {
    %c0 = arith.constant 0 : index
    %c0_0 = arith.constant 0 : index
    %c0_1 = arith.constant 0 : index
    %0 = vector.load %arg1[%c0, %c0_0, %c0_1] : memref<1x8x32xf32, #tpu.memory_space<vmem>>, vector<1x8x32xf32>
    %1 = vector.shape_cast %0 : vector<1x8x32xf32> to vector<8x32xf32>
    %c0_2 = arith.constant 0 : index
    %c0_3 = arith.constant 0 : index
    %2 = vector.load %arg3[%c0_2, %c0_3] : memref<1x32xf32, #tpu.memory_space<vmem>>, vector<1x32xf32>
    %c0_4 = arith.constant 0 : index
    %c0_5 = arith.constant 0 : index
    %3 = vector.load %arg4[%c0_4, %c0_5] : memref<1x32xf32, #tpu.memory_space<vmem>>, vector<1x32xf32>
    %cst = arith.constant dense<0.000000e+00> : vector<8xf32>
    %4 = vector.multi_reduction <add>, %1, %cst [1] : vector<8x32xf32> to vector<8xf32>
    %5 = vector.shape_cast %4 : vector<8xf32> to vector<8x1xf32>
    %cst_6 = arith.constant 3.200000e+01 : f32
    %6 = vector.broadcast %cst_6 : f32 to vector<8x1xf32>
    %7 = arith.divf %5, %6 : vector<8x1xf32>
    %8 = vector.broadcast %7 : vector<8x1xf32> to vector<8x32xf32>
    %9 = arith.subf %1, %8 : vector<8x32xf32>
    %10 = vector.broadcast %7 : vector<8x1xf32> to vector<8x32xf32>
    %11 = arith.subf %1, %10 : vector<8x32xf32>
    %12 = arith.mulf %9, %11 : vector<8x32xf32>
    %cst_7 = arith.constant dense<0.000000e+00> : vector<8xf32>
    %13 = vector.multi_reduction <add>, %12, %cst_7 [1] : vector<8x32xf32> to vector<8xf32>
    %14 = vector.shape_cast %13 : vector<8xf32> to vector<8x1xf32>
    %cst_8 = arith.constant 3.200000e+01 : f32
    %15 = vector.broadcast %cst_8 : f32 to vector<8x1xf32>
    %16 = arith.divf %14, %15 : vector<8x1xf32>
    %17 = vector.broadcast %7 : vector<8x1xf32> to vector<8x32xf32>
    %18 = arith.subf %1, %17 : vector<8x32xf32>
    %cst_9 = arith.constant 9.99999996E-13 : f32
    %19 = vector.broadcast %cst_9 : f32 to vector<8x1xf32>
    %20 = arith.addf %16, %19 : vector<8x1xf32>
    %21 = math.rsqrt %20 : vector<8x1xf32>
    %22 = vector.broadcast %21 : vector<8x1xf32> to vector<8x32xf32>
    %23 = arith.mulf %18, %22 : vector<8x32xf32>
    %24 = vector.broadcast %2 : vector<1x32xf32> to vector<8x32xf32>
    %25 = arith.mulf %23, %24 : vector<8x32xf32>
    %26 = vector.broadcast %3 : vector<1x32xf32> to vector<8x32xf32>
    %27 = arith.addf %25, %26 : vector<8x32xf32>
    %c0_10 = arith.constant 0 : index
    %c0_11 = arith.constant 0 : index
    %c0_12 = arith.constant 0 : index
    %28 = vector.load %arg2[%c0_10, %c0_11, %c0_12] : memref<1x1x8xf32, #tpu.memory_space<vmem>>, vector<1x1x8xf32>
    %29 = vector.shape_cast %28 : vector<1x1x8xf32> to vector<1x8xf32>
    %c0_13 = arith.constant 0 : index
    %c0_14 = arith.constant 0 : index
    %c0_15 = arith.constant 0 : index
    %30 = vector.load %arg6[%c0_13, %c0_14, %c0_15] : memref<2x8x96xf32, #tpu.memory_space<vmem>>, vector<1x1x96xf32>
    %31 = vector.shape_cast %30 : vector<1x1x96xf32> to vector<1x96xf32>
    %c0_16 = arith.constant 0 : index
    %c1 = arith.constant 1 : index
    %c0_17 = arith.constant 0 : index
    %32 = vector.load %arg6[%c0_16, %c1, %c0_17] : memref<2x8x96xf32, #tpu.memory_space<vmem>>, vector<1x1x32xf32>
    %33 = vector.shape_cast %32 : vector<1x1x32xf32> to vector<1x32xf32>
    %c0_18 = arith.constant 0 : index
    %c2 = arith.constant 2 : index
    %c0_19 = arith.constant 0 : index
    %34 = vector.load %arg6[%c0_18, %c2, %c0_19] : memref<2x8x96xf32, #tpu.memory_space<vmem>>, vector<1x1x32xf32>
    %35 = vector.shape_cast %34 : vector<1x1x32xf32> to vector<1x32xf32>
    %c0_20 = arith.constant 0 : index
    %c3 = arith.constant 3 : index
    %c0_21 = arith.constant 0 : index
    %36 = vector.load %arg6[%c0_20, %c3, %c0_21] : memref<2x8x96xf32, #tpu.memory_space<vmem>>, vector<1x1x32xf32>
    %37 = vector.shape_cast %36 : vector<1x1x32xf32> to vector<1x32xf32>
    %c0_22 = arith.constant 0 : index
    %c4 = arith.constant 4 : index
    %c0_23 = arith.constant 0 : index
    %38 = vector.load %arg6[%c0_22, %c4, %c0_23] : memref<2x8x96xf32, #tpu.memory_space<vmem>>, vector<1x1x64xf32>
    %39 = vector.shape_cast %38 : vector<1x1x64xf32> to vector<1x64xf32>
    %c0_24 = arith.constant 0 : index
    %c5 = arith.constant 5 : index
    %c0_25 = arith.constant 0 : index
    %40 = vector.load %arg6[%c0_24, %c5, %c0_25] : memref<2x8x96xf32, #tpu.memory_space<vmem>>, vector<1x1x32xf32>
    %41 = vector.shape_cast %40 : vector<1x1x32xf32> to vector<1x32xf32>
    %c0_26 = arith.constant 0 : index
    %c6 = arith.constant 6 : index
    %c0_27 = arith.constant 0 : index
    %42 = vector.load %arg6[%c0_26, %c6, %c0_27] : memref<2x8x96xf32, #tpu.memory_space<vmem>>, vector<1x1x32xf32>
    %43 = vector.shape_cast %42 : vector<1x1x32xf32> to vector<1x32xf32>
    %c0_28 = arith.constant 0 : index
    %c7 = arith.constant 7 : index
    %c0_29 = arith.constant 0 : index
    %44 = vector.load %arg6[%c0_28, %c7, %c0_29] : memref<2x8x96xf32, #tpu.memory_space<vmem>>, vector<1x1x32xf32>
    %45 = vector.shape_cast %44 : vector<1x1x32xf32> to vector<1x32xf32>
    %46 = arith.truncf %27 : vector<8x32xf32> to vector<8x32xbf16>
    %c0_30 = arith.constant 0 : index
    %c0_31 = arith.constant 0 : index
    %c0_32 = arith.constant 0 : index
    %47 = vector.load %arg5[%c0_30, %c0_31, %c0_32] : memref<2x32x96xbf16, #tpu.memory_space<vmem>>, vector<1x32x96xbf16>
    %48 = vector.shape_cast %47 : vector<1x32x96xbf16> to vector<32x96xbf16>
    %cst_33 = arith.constant dense<0.000000e+00> : vector<8x96xf32>
    %49 = tpu.matmul %46, %48, %cst_33 {dimension_numbers = #tpu.dot_dimension_numbers<[1], [0], [0], [1], [0, 0, 1, 1], [], []>} : vector<8x32xbf16>, vector<32x96xbf16>, vector<8x96xf32> -> vector<8x96xf32>
    %50 = vector.broadcast %31 : vector<1x96xf32> to vector<8x96xf32>
    %51 = arith.addf %49, %50 : vector<8x96xf32>
    %52 = vector.extract_strided_slice %51 {offsets = [0, 0], sizes = [8, 16], strides = [1, 1]} : vector<8x96xf32> to vector<8x16xf32>
    %53 = vector.extract_strided_slice %51 {offsets = [0, 16], sizes = [8, 16], strides = [1, 1]} : vector<8x96xf32> to vector<8x16xf32>
    %54 = vector.shape_cast %52 : vector<8x16xf32> to vector<1x8x16xf32>
    %55 = vector.shape_cast %53 : vector<8x16xf32> to vector<1x8x16xf32>
    %56 = tpu.concatenate %54, %55 in 0 : vector<1x8x16xf32>, vector<1x8x16xf32> -> vector<2x8x16xf32>
    %57 = vector.extract_strided_slice %51 {offsets = [0, 32], sizes = [8, 16], strides = [1, 1]} : vector<8x96xf32> to vector<8x16xf32>
    %58 = vector.extract_strided_slice %51 {offsets = [0, 48], sizes = [8, 16], strides = [1, 1]} : vector<8x96xf32> to vector<8x16xf32>
    %59 = vector.shape_cast %57 : vector<8x16xf32> to vector<1x8x16xf32>
    %60 = vector.shape_cast %58 : vector<8x16xf32> to vector<1x8x16xf32>
    %61 = tpu.concatenate %59, %60 in 0 : vector<1x8x16xf32>, vector<1x8x16xf32> -> vector<2x8x16xf32>
    %62 = vector.extract_strided_slice %51 {offsets = [0, 64], sizes = [8, 16], strides = [1, 1]} : vector<8x96xf32> to vector<8x16xf32>
    %63 = vector.extract_strided_slice %51 {offsets = [0, 80], sizes = [8, 16], strides = [1, 1]} : vector<8x96xf32> to vector<8x16xf32>
    %64 = vector.shape_cast %62 : vector<8x16xf32> to vector<1x8x16xf32>
    %65 = vector.shape_cast %63 : vector<8x16xf32> to vector<1x8x16xf32>
    %66 = tpu.concatenate %64, %65 in 0 : vector<1x8x16xf32>, vector<1x8x16xf32> -> vector<2x8x16xf32>
    %67 = arith.truncf %56 : vector<2x8x16xf32> to vector<2x8x16xbf16>
    %68 = arith.truncf %61 : vector<2x8x16xf32> to vector<2x8x16xbf16>
    %cst_34 = arith.constant dense<0.000000e+00> : vector<2x8x8xf32>
    %69 = tpu.matmul %67, %68, %cst_34 {dimension_numbers = #tpu.dot_dimension_numbers<[2], [2], [1], [1], [0, 0, 0, 1, 1, 1], [0], [0]>} : vector<2x8x16xbf16>, vector<2x8x16xbf16>, vector<2x8x8xf32> -> vector<2x8x8xf32>
    %cst_35 = arith.constant 2.500000e-01 : f32
    %70 = vector.broadcast %cst_35 : f32 to vector<2x8x8xf32>
    %71 = arith.mulf %69, %70 : vector<2x8x8xf32>
    %72 = vector.shape_cast %29 : vector<1x8xf32> to vector<1x1x8xf32>
    %73 = vector.broadcast %72 : vector<1x1x8xf32> to vector<2x8x8xf32>
    %74 = arith.addf %71, %73 : vector<2x8x8xf32>
    %cst_36 = arith.constant dense<0xFF800000> : vector<2x8xf32>
    %75 = vector.multi_reduction <maximumf>, %74, %cst_36 [2] : vector<2x8x8xf32> to vector<2x8xf32>
    %76 = vector.shape_cast %75 : vector<2x8xf32> to vector<2x8x1xf32>
    %77 = vector.broadcast %76 : vector<2x8x1xf32> to vector<2x8x8xf32>
    %78 = arith.subf %74, %77 : vector<2x8x8xf32>
    %79 = math.exp %78 : vector<2x8x8xf32>
    %cst_37 = arith.constant dense<0.000000e+00> : vector<2x8xf32>
    %80 = vector.multi_reduction <add>, %79, %cst_37 [2] : vector<2x8x8xf32> to vector<2x8xf32>
    %81 = vector.shape_cast %80 : vector<2x8xf32> to vector<2x8x1xf32>
    %82 = vector.broadcast %81 : vector<2x8x1xf32> to vector<2x8x8xf32>
    %83 = arith.divf %79, %82 : vector<2x8x8xf32>
    %84 = arith.truncf %83 : vector<2x8x8xf32> to vector<2x8x8xbf16>
    %85 = arith.truncf %66 : vector<2x8x16xf32> to vector<2x8x16xbf16>
    %cst_38 = arith.constant dense<0.000000e+00> : vector<2x8x16xf32>
    %86 = tpu.matmul %84, %85, %cst_38 {dimension_numbers = #tpu.dot_dimension_numbers<[2], [1], [1], [2], [0, 0, 0, 1, 1, 2], [0], [0]>} : vector<2x8x8xbf16>, vector<2x8x16xbf16>, vector<2x8x16xf32> -> vector<2x8x16xf32>
    %87 = arith.truncf %86 : vector<2x8x16xf32> to vector<2x8x16xbf16>
    %c0_39 = arith.constant 0 : index
    %c0_40 = arith.constant 0 : index
    %c0_41 = arith.constant 0 : index
    %c0_42 = arith.constant 0 : index
    %88 = vector.load %arg7[%c0_39, %c0_40, %c0_41, %c0_42] : memref<2x2x16x32xbf16, #tpu.memory_space<vmem>>, vector<1x2x16x32xbf16>
    %89 = vector.shape_cast %88 : vector<1x2x16x32xbf16> to vector<2x16x32xbf16>
    %cst_43 = arith.constant dense<0.000000e+00> : vector<2x8x32xf32>
    %90 = tpu.matmul %87, %89, %cst_43 {dimension_numbers = #tpu.dot_dimension_numbers<[2], [1], [1], [2], [0, 0, 0, 1, 1, 2], [0], [0]>} : vector<2x8x16xbf16>, vector<2x16x32xbf16>, vector<2x8x32xf32> -> vector<2x8x32xf32>
    %cst_44 = arith.constant dense<0.000000e+00> : vector<8x32xf32>
    %91 = vector.multi_reduction <add>, %90, %cst_44 [0] : vector<2x8x32xf32> to vector<8x32xf32>
    %92 = vector.broadcast %33 : vector<1x32xf32> to vector<8x32xf32>
    %93 = arith.addf %91, %92 : vector<8x32xf32>
    %94 = arith.addf %93, %27 : vector<8x32xf32>
    %cst_45 = arith.constant dense<0.000000e+00> : vector<8xf32>
    %95 = vector.multi_reduction <add>, %94, %cst_45 [1] : vector<8x32xf32> to vector<8xf32>
    %96 = vector.shape_cast %95 : vector<8xf32> to vector<8x1xf32>
    %cst_46 = arith.constant 3.200000e+01 : f32
    %97 = vector.broadcast %cst_46 : f32 to vector<8x1xf32>
    %98 = arith.divf %96, %97 : vector<8x1xf32>
    %99 = vector.broadcast %98 : vector<8x1xf32> to vector<8x32xf32>
    %100 = arith.subf %94, %99 : vector<8x32xf32>
    %101 = vector.broadcast %98 : vector<8x1xf32> to vector<8x32xf32>
    %102 = arith.subf %94, %101 : vector<8x32xf32>
    %103 = arith.mulf %100, %102 : vector<8x32xf32>
    %cst_47 = arith.constant dense<0.000000e+00> : vector<8xf32>
    %104 = vector.multi_reduction <add>, %103, %cst_47 [1] : vector<8x32xf32> to vector<8xf32>
    %105 = vector.shape_cast %104 : vector<8xf32> to vector<8x1xf32>
    %cst_48 = arith.constant 3.200000e+01 : f32
    %106 = vector.broadcast %cst_48 : f32 to vector<8x1xf32>
    %107 = arith.divf %105, %106 : vector<8x1xf32>
    %108 = vector.broadcast %98 : vector<8x1xf32> to vector<8x32xf32>
    %109 = arith.subf %94, %108 : vector<8x32xf32>
    %cst_49 = arith.constant 9.99999996E-13 : f32
    %110 = vector.broadcast %cst_49 : f32 to vector<8x1xf32>
    %111 = arith.addf %107, %110 : vector<8x1xf32>
    %112 = math.rsqrt %111 : vector<8x1xf32>
    %113 = vector.broadcast %112 : vector<8x1xf32> to vector<8x32xf32>
    %114 = arith.mulf %109, %113 : vector<8x32xf32>
    %115 = vector.broadcast %35 : vector<1x32xf32> to vector<8x32xf32>
    %116 = arith.mulf %114, %115 : vector<8x32xf32>
    %117 = vector.broadcast %37 : vector<1x32xf32> to vector<8x32xf32>
    %118 = arith.addf %116, %117 : vector<8x32xf32>
    %119 = arith.truncf %118 : vector<8x32xf32> to vector<8x32xbf16>
    %c0_50 = arith.constant 0 : index
    %c0_51 = arith.constant 0 : index
    %c0_52 = arith.constant 0 : index
    %120 = vector.load %arg8[%c0_50, %c0_51, %c0_52] : memref<2x32x64xbf16, #tpu.memory_space<vmem>>, vector<1x32x64xbf16>
    %121 = vector.shape_cast %120 : vector<1x32x64xbf16> to vector<32x64xbf16>
    %cst_53 = arith.constant dense<0.000000e+00> : vector<8x64xf32>
    %122 = tpu.matmul %119, %121, %cst_53 {dimension_numbers = #tpu.dot_dimension_numbers<[1], [0], [0], [1], [0, 0, 1, 1], [], []>} : vector<8x32xbf16>, vector<32x64xbf16>, vector<8x64xf32> -> vector<8x64xf32>
    %123 = vector.broadcast %39 : vector<1x64xf32> to vector<8x64xf32>
    %124 = arith.addf %122, %123 : vector<8x64xf32>
    %125 = arith.mulf %124, %124 : vector<8x64xf32>
    %126 = arith.mulf %124, %125 : vector<8x64xf32>
    %cst_54 = arith.constant 4.471500e-02 : f32
    %127 = vector.broadcast %cst_54 : f32 to vector<8x64xf32>
    %128 = arith.mulf %127, %126 : vector<8x64xf32>
    %129 = arith.addf %124, %128 : vector<8x64xf32>
    %cst_55 = arith.constant 0.797884583 : f32
    %130 = vector.broadcast %cst_55 : f32 to vector<8x64xf32>
    %131 = arith.mulf %130, %129 : vector<8x64xf32>
    %132 = math.tanh %131 : vector<8x64xf32>
    %cst_56 = arith.constant 1.000000e+00 : f32
    %133 = vector.broadcast %cst_56 : f32 to vector<8x64xf32>
    %134 = arith.addf %133, %132 : vector<8x64xf32>
    %cst_57 = arith.constant 5.000000e-01 : f32
    %135 = vector.broadcast %cst_57 : f32 to vector<8x64xf32>
    %136 = arith.mulf %135, %134 : vector<8x64xf32>
    %137 = arith.mulf %124, %136 : vector<8x64xf32>
    %138 = arith.truncf %137 : vector<8x64xf32> to vector<8x64xbf16>
    %c0_58 = arith.constant 0 : index
    %c0_59 = arith.constant 0 : index
    %c0_60 = arith.constant 0 : index
    %139 = vector.load %arg9[%c0_58, %c0_59, %c0_60] : memref<2x64x32xbf16, #tpu.memory_space<vmem>>, vector<1x64x32xbf16>
    %140 = vector.shape_cast %139 : vector<1x64x32xbf16> to vector<64x32xbf16>
    %cst_61 = arith.constant dense<0.000000e+00> : vector<8x32xf32>
    %141 = tpu.matmul %138, %140, %cst_61 {dimension_numbers = #tpu.dot_dimension_numbers<[1], [0], [0], [1], [0, 0, 1, 1], [], []>} : vector<8x64xbf16>, vector<64x32xbf16>, vector<8x32xf32> -> vector<8x32xf32>
    %142 = vector.broadcast %41 : vector<1x32xf32> to vector<8x32xf32>
    %143 = arith.addf %141, %142 : vector<8x32xf32>
    %144 = arith.addf %143, %118 : vector<8x32xf32>
    %cst_62 = arith.constant dense<0.000000e+00> : vector<8xf32>
    %145 = vector.multi_reduction <add>, %144, %cst_62 [1] : vector<8x32xf32> to vector<8xf32>
    %146 = vector.shape_cast %145 : vector<8xf32> to vector<8x1xf32>
    %cst_63 = arith.constant 3.200000e+01 : f32
    %147 = vector.broadcast %cst_63 : f32 to vector<8x1xf32>
    %148 = arith.divf %146, %147 : vector<8x1xf32>
    %149 = vector.broadcast %148 : vector<8x1xf32> to vector<8x32xf32>
    %150 = arith.subf %144, %149 : vector<8x32xf32>
    %151 = vector.broadcast %148 : vector<8x1xf32> to vector<8x32xf32>
    %152 = arith.subf %144, %151 : vector<8x32xf32>
    %153 = arith.mulf %150, %152 : vector<8x32xf32>
    %cst_64 = arith.constant dense<0.000000e+00> : vector<8xf32>
    %154 = vector.multi_reduction <add>, %153, %cst_64 [1] : vector<8x32xf32> to vector<8xf32>
    %155 = vector.shape_cast %154 : vector<8xf32> to vector<8x1xf32>
    %cst_65 = arith.constant 3.200000e+01 : f32
    %156 = vector.broadcast %cst_65 : f32 to vector<8x1xf32>
    %157 = arith.divf %155, %156 : vector<8x1xf32>
    %158 = vector.broadcast %148 : vector<8x1xf32> to vector<8x32xf32>
    %159 = arith.subf %144, %158 : vector<8x32xf32>
    %cst_66 = arith.constant 9.99999996E-13 : f32
    %160 = vector.broadcast %cst_66 : f32 to vector<8x1xf32>
    %161 = arith.addf %157, %160 : vector<8x1xf32>
    %162 = math.rsqrt %161 : vector<8x1xf32>
    %163 = vector.broadcast %162 : vector<8x1xf32> to vector<8x32xf32>
    %164 = arith.mulf %159, %163 : vector<8x32xf32>
    %165 = vector.broadcast %43 : vector<1x32xf32> to vector<8x32xf32>
    %166 = arith.mulf %164, %165 : vector<8x32xf32>
    %167 = vector.broadcast %45 : vector<1x32xf32> to vector<8x32xf32>
    %168 = arith.addf %166, %167 : vector<8x32xf32>
    %c1_67 = arith.constant 1 : index
    %c0_68 = arith.constant 0 : index
    %c0_69 = arith.constant 0 : index
    %169 = vector.load %arg6[%c1_67, %c0_68, %c0_69] : memref<2x8x96xf32, #tpu.memory_space<vmem>>, vector<1x1x96xf32>
    %170 = vector.shape_cast %169 : vector<1x1x96xf32> to vector<1x96xf32>
    %c1_70 = arith.constant 1 : index
    %c1_71 = arith.constant 1 : index
    %c0_72 = arith.constant 0 : index
    %171 = vector.load %arg6[%c1_70, %c1_71, %c0_72] : memref<2x8x96xf32, #tpu.memory_space<vmem>>, vector<1x1x32xf32>
    %172 = vector.shape_cast %171 : vector<1x1x32xf32> to vector<1x32xf32>
    %c1_73 = arith.constant 1 : index
    %c2_74 = arith.constant 2 : index
    %c0_75 = arith.constant 0 : index
    %173 = vector.load %arg6[%c1_73, %c2_74, %c0_75] : memref<2x8x96xf32, #tpu.memory_space<vmem>>, vector<1x1x32xf32>
    %174 = vector.shape_cast %173 : vector<1x1x32xf32> to vector<1x32xf32>
    %c1_76 = arith.constant 1 : index
    %c3_77 = arith.constant 3 : index
    %c0_78 = arith.constant 0 : index
    %175 = vector.load %arg6[%c1_76, %c3_77, %c0_78] : memref<2x8x96xf32, #tpu.memory_space<vmem>>, vector<1x1x32xf32>
    %176 = vector.shape_cast %175 : vector<1x1x32xf32> to vector<1x32xf32>
    %c1_79 = arith.constant 1 : index
    %c4_80 = arith.constant 4 : index
    %c0_81 = arith.constant 0 : index
    %177 = vector.load %arg6[%c1_79, %c4_80, %c0_81] : memref<2x8x96xf32, #tpu.memory_space<vmem>>, vector<1x1x64xf32>
    %178 = vector.shape_cast %177 : vector<1x1x64xf32> to vector<1x64xf32>
    %c1_82 = arith.constant 1 : index
    %c5_83 = arith.constant 5 : index
    %c0_84 = arith.constant 0 : index
    %179 = vector.load %arg6[%c1_82, %c5_83, %c0_84] : memref<2x8x96xf32, #tpu.memory_space<vmem>>, vector<1x1x32xf32>
    %180 = vector.shape_cast %179 : vector<1x1x32xf32> to vector<1x32xf32>
    %c1_85 = arith.constant 1 : index
    %c6_86 = arith.constant 6 : index
    %c0_87 = arith.constant 0 : index
    %181 = vector.load %arg6[%c1_85, %c6_86, %c0_87] : memref<2x8x96xf32, #tpu.memory_space<vmem>>, vector<1x1x32xf32>
    %182 = vector.shape_cast %181 : vector<1x1x32xf32> to vector<1x32xf32>
    %c1_88 = arith.constant 1 : index
    %c7_89 = arith.constant 7 : index
    %c0_90 = arith.constant 0 : index
    %183 = vector.load %arg6[%c1_88, %c7_89, %c0_90] : memref<2x8x96xf32, #tpu.memory_space<vmem>>, vector<1x1x32xf32>
    %184 = vector.shape_cast %183 : vector<1x1x32xf32> to vector<1x32xf32>
    %185 = arith.truncf %168 : vector<8x32xf32> to vector<8x32xbf16>
    %c1_91 = arith.constant 1 : index
    %c0_92 = arith.constant 0 : index
    %c0_93 = arith.constant 0 : index
    %186 = vector.load %arg5[%c1_91, %c0_92, %c0_93] : memref<2x32x96xbf16, #tpu.memory_space<vmem>>, vector<1x32x96xbf16>
    %187 = vector.shape_cast %186 : vector<1x32x96xbf16> to vector<32x96xbf16>
    %cst_94 = arith.constant dense<0.000000e+00> : vector<8x96xf32>
    %188 = tpu.matmul %185, %187, %cst_94 {dimension_numbers = #tpu.dot_dimension_numbers<[1], [0], [0], [1], [0, 0, 1, 1], [], []>} : vector<8x32xbf16>, vector<32x96xbf16>, vector<8x96xf32> -> vector<8x96xf32>
    %189 = vector.broadcast %170 : vector<1x96xf32> to vector<8x96xf32>
    %190 = arith.addf %188, %189 : vector<8x96xf32>
    %191 = vector.extract_strided_slice %190 {offsets = [0, 0], sizes = [8, 16], strides = [1, 1]} : vector<8x96xf32> to vector<8x16xf32>
    %192 = vector.extract_strided_slice %190 {offsets = [0, 16], sizes = [8, 16], strides = [1, 1]} : vector<8x96xf32> to vector<8x16xf32>
    %193 = vector.shape_cast %191 : vector<8x16xf32> to vector<1x8x16xf32>
    %194 = vector.shape_cast %192 : vector<8x16xf32> to vector<1x8x16xf32>
    %195 = tpu.concatenate %193, %194 in 0 : vector<1x8x16xf32>, vector<1x8x16xf32> -> vector<2x8x16xf32>
    %196 = vector.extract_strided_slice %190 {offsets = [0, 32], sizes = [8, 16], strides = [1, 1]} : vector<8x96xf32> to vector<8x16xf32>
    %197 = vector.extract_strided_slice %190 {offsets = [0, 48], sizes = [8, 16], strides = [1, 1]} : vector<8x96xf32> to vector<8x16xf32>
    %198 = vector.shape_cast %196 : vector<8x16xf32> to vector<1x8x16xf32>
    %199 = vector.shape_cast %197 : vector<8x16xf32> to vector<1x8x16xf32>
    %200 = tpu.concatenate %198, %199 in 0 : vector<1x8x16xf32>, vector<1x8x16xf32> -> vector<2x8x16xf32>
    %201 = vector.extract_strided_slice %190 {offsets = [0, 64], sizes = [8, 16], strides = [1, 1]} : vector<8x96xf32> to vector<8x16xf32>
    %202 = vector.extract_strided_slice %190 {offsets = [0, 80], sizes = [8, 16], strides = [1, 1]} : vector<8x96xf32> to vector<8x16xf32>
    %203 = vector.shape_cast %201 : vector<8x16xf32> to vector<1x8x16xf32>
    %204 = vector.shape_cast %202 : vector<8x16xf32> to vector<1x8x16xf32>
    %205 = tpu.concatenate %203, %204 in 0 : vector<1x8x16xf32>, vector<1x8x16xf32> -> vector<2x8x16xf32>
    %206 = arith.truncf %195 : vector<2x8x16xf32> to vector<2x8x16xbf16>
    %207 = arith.truncf %200 : vector<2x8x16xf32> to vector<2x8x16xbf16>
    %cst_95 = arith.constant dense<0.000000e+00> : vector<2x8x8xf32>
    %208 = tpu.matmul %206, %207, %cst_95 {dimension_numbers = #tpu.dot_dimension_numbers<[2], [2], [1], [1], [0, 0, 0, 1, 1, 1], [0], [0]>} : vector<2x8x16xbf16>, vector<2x8x16xbf16>, vector<2x8x8xf32> -> vector<2x8x8xf32>
    %cst_96 = arith.constant 2.500000e-01 : f32
    %209 = vector.broadcast %cst_96 : f32 to vector<2x8x8xf32>
    %210 = arith.mulf %208, %209 : vector<2x8x8xf32>
    %211 = vector.shape_cast %29 : vector<1x8xf32> to vector<1x1x8xf32>
    %212 = vector.broadcast %211 : vector<1x1x8xf32> to vector<2x8x8xf32>
    %213 = arith.addf %210, %212 : vector<2x8x8xf32>
    %cst_97 = arith.constant dense<0xFF800000> : vector<2x8xf32>
    %214 = vector.multi_reduction <maximumf>, %213, %cst_97 [2] : vector<2x8x8xf32> to vector<2x8xf32>
    %215 = vector.shape_cast %214 : vector<2x8xf32> to vector<2x8x1xf32>
    %216 = vector.broadcast %215 : vector<2x8x1xf32> to vector<2x8x8xf32>
    %217 = arith.subf %213, %216 : vector<2x8x8xf32>
    %218 = math.exp %217 : vector<2x8x8xf32>
    %cst_98 = arith.constant dense<0.000000e+00> : vector<2x8xf32>
    %219 = vector.multi_reduction <add>, %218, %cst_98 [2] : vector<2x8x8xf32> to vector<2x8xf32>
    %220 = vector.shape_cast %219 : vector<2x8xf32> to vector<2x8x1xf32>
    %221 = vector.broadcast %220 : vector<2x8x1xf32> to vector<2x8x8xf32>
    %222 = arith.divf %218, %221 : vector<2x8x8xf32>
    %223 = arith.truncf %222 : vector<2x8x8xf32> to vector<2x8x8xbf16>
    %224 = arith.truncf %205 : vector<2x8x16xf32> to vector<2x8x16xbf16>
    %cst_99 = arith.constant dense<0.000000e+00> : vector<2x8x16xf32>
    %225 = tpu.matmul %223, %224, %cst_99 {dimension_numbers = #tpu.dot_dimension_numbers<[2], [1], [1], [2], [0, 0, 0, 1, 1, 2], [0], [0]>} : vector<2x8x8xbf16>, vector<2x8x16xbf16>, vector<2x8x16xf32> -> vector<2x8x16xf32>
    %226 = arith.truncf %225 : vector<2x8x16xf32> to vector<2x8x16xbf16>
    %c1_100 = arith.constant 1 : index
    %c0_101 = arith.constant 0 : index
    %c0_102 = arith.constant 0 : index
    %c0_103 = arith.constant 0 : index
    %227 = vector.load %arg7[%c1_100, %c0_101, %c0_102, %c0_103] : memref<2x2x16x32xbf16, #tpu.memory_space<vmem>>, vector<1x2x16x32xbf16>
    %228 = vector.shape_cast %227 : vector<1x2x16x32xbf16> to vector<2x16x32xbf16>
    %cst_104 = arith.constant dense<0.000000e+00> : vector<2x8x32xf32>
    %229 = tpu.matmul %226, %228, %cst_104 {dimension_numbers = #tpu.dot_dimension_numbers<[2], [1], [1], [2], [0, 0, 0, 1, 1, 2], [0], [0]>} : vector<2x8x16xbf16>, vector<2x16x32xbf16>, vector<2x8x32xf32> -> vector<2x8x32xf32>
    %cst_105 = arith.constant dense<0.000000e+00> : vector<8x32xf32>
    %230 = vector.multi_reduction <add>, %229, %cst_105 [0] : vector<2x8x32xf32> to vector<8x32xf32>
    %231 = vector.broadcast %172 : vector<1x32xf32> to vector<8x32xf32>
    %232 = arith.addf %230, %231 : vector<8x32xf32>
    %233 = arith.addf %232, %168 : vector<8x32xf32>
    %cst_106 = arith.constant dense<0.000000e+00> : vector<8xf32>
    %234 = vector.multi_reduction <add>, %233, %cst_106 [1] : vector<8x32xf32> to vector<8xf32>
    %235 = vector.shape_cast %234 : vector<8xf32> to vector<8x1xf32>
    %cst_107 = arith.constant 3.200000e+01 : f32
    %236 = vector.broadcast %cst_107 : f32 to vector<8x1xf32>
    %237 = arith.divf %235, %236 : vector<8x1xf32>
    %238 = vector.broadcast %237 : vector<8x1xf32> to vector<8x32xf32>
    %239 = arith.subf %233, %238 : vector<8x32xf32>
    %240 = vector.broadcast %237 : vector<8x1xf32> to vector<8x32xf32>
    %241 = arith.subf %233, %240 : vector<8x32xf32>
    %242 = arith.mulf %239, %241 : vector<8x32xf32>
    %cst_108 = arith.constant dense<0.000000e+00> : vector<8xf32>
    %243 = vector.multi_reduction <add>, %242, %cst_108 [1] : vector<8x32xf32> to vector<8xf32>
    %244 = vector.shape_cast %243 : vector<8xf32> to vector<8x1xf32>
    %cst_109 = arith.constant 3.200000e+01 : f32
    %245 = vector.broadcast %cst_109 : f32 to vector<8x1xf32>
    %246 = arith.divf %244, %245 : vector<8x1xf32>
    %247 = vector.broadcast %237 : vector<8x1xf32> to vector<8x32xf32>
    %248 = arith.subf %233, %247 : vector<8x32xf32>
    %cst_110 = arith.constant 9.99999996E-13 : f32
    %249 = vector.broadcast %cst_110 : f32 to vector<8x1xf32>
    %250 = arith.addf %246, %249 : vector<8x1xf32>
    %251 = math.rsqrt %250 : vector<8x1xf32>
    %252 = vector.broadcast %251 : vector<8x1xf32> to vector<8x32xf32>
    %253 = arith.mulf %248, %252 : vector<8x32xf32>
    %254 = vector.broadcast %174 : vector<1x32xf32> to vector<8x32xf32>
    %255 = arith.mulf %253, %254 : vector<8x32xf32>
    %256 = vector.broadcast %176 : vector<1x32xf32> to vector<8x32xf32>
    %257 = arith.addf %255, %256 : vector<8x32xf32>
    %258 = arith.truncf %257 : vector<8x32xf32> to vector<8x32xbf16>
    %c1_111 = arith.constant 1 : index
    %c0_112 = arith.constant 0 : index
    %c0_113 = arith.constant 0 : index
    %259 = vector.load %arg8[%c1_111, %c0_112, %c0_113] : memref<2x32x64xbf16, #tpu.memory_space<vmem>>, vector<1x32x64xbf16>
    %260 = vector.shape_cast %259 : vector<1x32x64xbf16> to vector<32x64xbf16>
    %cst_114 = arith.constant dense<0.000000e+00> : vector<8x64xf32>
    %261 = tpu.matmul %258, %260, %cst_114 {dimension_numbers = #tpu.dot_dimension_numbers<[1], [0], [0], [1], [0, 0, 1, 1], [], []>} : vector<8x32xbf16>, vector<32x64xbf16>, vector<8x64xf32> -> vector<8x64xf32>
    %262 = vector.broadcast %178 : vector<1x64xf32> to vector<8x64xf32>
    %263 = arith.addf %261, %262 : vector<8x64xf32>
    %264 = arith.mulf %263, %263 : vector<8x64xf32>
    %265 = arith.mulf %263, %264 : vector<8x64xf32>
    %cst_115 = arith.constant 4.471500e-02 : f32
    %266 = vector.broadcast %cst_115 : f32 to vector<8x64xf32>
    %267 = arith.mulf %266, %265 : vector<8x64xf32>
    %268 = arith.addf %263, %267 : vector<8x64xf32>
    %cst_116 = arith.constant 0.797884583 : f32
    %269 = vector.broadcast %cst_116 : f32 to vector<8x64xf32>
    %270 = arith.mulf %269, %268 : vector<8x64xf32>
    %271 = math.tanh %270 : vector<8x64xf32>
    %cst_117 = arith.constant 1.000000e+00 : f32
    %272 = vector.broadcast %cst_117 : f32 to vector<8x64xf32>
    %273 = arith.addf %272, %271 : vector<8x64xf32>
    %cst_118 = arith.constant 5.000000e-01 : f32
    %274 = vector.broadcast %cst_118 : f32 to vector<8x64xf32>
    %275 = arith.mulf %274, %273 : vector<8x64xf32>
    %276 = arith.mulf %263, %275 : vector<8x64xf32>
    %277 = arith.truncf %276 : vector<8x64xf32> to vector<8x64xbf16>
    %c1_119 = arith.constant 1 : index
    %c0_120 = arith.constant 0 : index
    %c0_121 = arith.constant 0 : index
    %278 = vector.load %arg9[%c1_119, %c0_120, %c0_121] : memref<2x64x32xbf16, #tpu.memory_space<vmem>>, vector<1x64x32xbf16>
    %279 = vector.shape_cast %278 : vector<1x64x32xbf16> to vector<64x32xbf16>
    %cst_122 = arith.constant dense<0.000000e+00> : vector<8x32xf32>
    %280 = tpu.matmul %277, %279, %cst_122 {dimension_numbers = #tpu.dot_dimension_numbers<[1], [0], [0], [1], [0, 0, 1, 1], [], []>} : vector<8x64xbf16>, vector<64x32xbf16>, vector<8x32xf32> -> vector<8x32xf32>
    %281 = vector.broadcast %180 : vector<1x32xf32> to vector<8x32xf32>
    %282 = arith.addf %280, %281 : vector<8x32xf32>
    %283 = arith.addf %282, %257 : vector<8x32xf32>
    %cst_123 = arith.constant dense<0.000000e+00> : vector<8xf32>
    %284 = vector.multi_reduction <add>, %283, %cst_123 [1] : vector<8x32xf32> to vector<8xf32>
    %285 = vector.shape_cast %284 : vector<8xf32> to vector<8x1xf32>
    %cst_124 = arith.constant 3.200000e+01 : f32
    %286 = vector.broadcast %cst_124 : f32 to vector<8x1xf32>
    %287 = arith.divf %285, %286 : vector<8x1xf32>
    %288 = vector.broadcast %287 : vector<8x1xf32> to vector<8x32xf32>
    %289 = arith.subf %283, %288 : vector<8x32xf32>
    %290 = vector.broadcast %287 : vector<8x1xf32> to vector<8x32xf32>
    %291 = arith.subf %283, %290 : vector<8x32xf32>
    %292 = arith.mulf %289, %291 : vector<8x32xf32>
    %cst_125 = arith.constant dense<0.000000e+00> : vector<8xf32>
    %293 = vector.multi_reduction <add>, %292, %cst_125 [1] : vector<8x32xf32> to vector<8xf32>
    %294 = vector.shape_cast %293 : vector<8xf32> to vector<8x1xf32>
    %cst_126 = arith.constant 3.200000e+01 : f32
    %295 = vector.broadcast %cst_126 : f32 to vector<8x1xf32>
    %296 = arith.divf %294, %295 : vector<8x1xf32>
    %297 = vector.broadcast %287 : vector<8x1xf32> to vector<8x32xf32>
    %298 = arith.subf %283, %297 : vector<8x32xf32>
    %cst_127 = arith.constant 9.99999996E-13 : f32
    %299 = vector.broadcast %cst_127 : f32 to vector<8x1xf32>
    %300 = arith.addf %296, %299 : vector<8x1xf32>
    %301 = math.rsqrt %300 : vector<8x1xf32>
    %302 = vector.broadcast %301 : vector<8x1xf32> to vector<8x32xf32>
    %303 = arith.mulf %298, %302 : vector<8x32xf32>
    %304 = vector.broadcast %182 : vector<1x32xf32> to vector<8x32xf32>
    %305 = arith.mulf %303, %304 : vector<8x32xf32>
    %306 = vector.broadcast %184 : vector<1x32xf32> to vector<8x32xf32>
    %307 = arith.addf %305, %306 : vector<8x32xf32>
    %308 = vector.extract_strided_slice %307 {offsets = [0, 0], sizes = [1, 32], strides = [1, 1]} : vector<8x32xf32> to vector<1x32xf32>
    %309 = arith.truncf %308 : vector<1x32xf32> to vector<1x32xbf16>
    %c0_128 = arith.constant 0 : index
    %c0_129 = arith.constant 0 : index
    %310 = vector.load %arg10[%c0_128, %c0_129] : memref<32x32xbf16, #tpu.memory_space<vmem>>, vector<32x32xbf16>
    %cst_130 = arith.constant dense<0.000000e+00> : vector<1x32xf32>
    %311 = tpu.matmul %309, %310, %cst_130 {dimension_numbers = #tpu.dot_dimension_numbers<[1], [0], [0], [1], [0, 0, 1, 1], [], []>} : vector<1x32xbf16>, vector<32x32xbf16>, vector<1x32xf32> -> vector<1x32xf32>
    %c0_131 = arith.constant 0 : index
    %c0_132 = arith.constant 0 : index
    %312 = vector.load %arg11[%c0_131, %c0_132] : memref<1x32xf32, #tpu.memory_space<vmem>>, vector<1x32xf32>
    %313 = arith.addf %311, %312 : vector<1x32xf32>
    %314 = math.tanh %313 : vector<1x32xf32>
    %315 = vector.shape_cast %314 : vector<1x32xf32> to vector<1x1x32xf32>
    %c0_133 = arith.constant 0 : index
    %c0_134 = arith.constant 0 : index
    %c0_135 = arith.constant 0 : index
    %316 = vector.load %arg12[%c0_133, %c0_134, %c0_135] : memref<1x1x32xf32, #tpu.memory_space<vmem>>, vector<1x1x32xf32>
    tpu.vector_store %arg12[%c0_133, %c0_134, %c0_135], %315 {strides = array<i32>} : memref<1x1x32xf32, #tpu.memory_space<vmem>>, vector<1x1x32xf32>,
    return
  }
  func.func @transform_0(%arg0: i32) -> (i32, i32, i32) {
    %c0_i32 = arith.constant 0 : i32
    %c0_i32_0 = arith.constant 0 : i32
    %c0_i32_1 = arith.constant 0 : i32
    return %arg0, %c0_i32, %c0_i32_0 : i32, i32, i32
  }
  func.func @transform_1(%arg0: i32) -> (i32, i32, i32) {
    %c0_i32 = arith.constant 0 : i32
    %c0_i32_0 = arith.constant 0 : i32
    %c0_i32_1 = arith.constant 0 : i32
    return %arg0, %c0_i32, %c0_i32_0 : i32, i32, i32
  }
  func.func @transform_2(%arg0: i32) -> (i32, i32) {
    %c0_i32 = arith.constant 0 : i32
    %c0_i32_0 = arith.constant 0 : i32
    %c0_i32_1 = arith.constant 0 : i32
    return %c0_i32, %c0_i32_0 : i32, i32
  }
  func.func @transform_3(%arg0: i32) -> (i32, i32) {
    %c0_i32 = arith.constant 0 : i32
    %c0_i32_0 = arith.constant 0 : i32
    %c0_i32_1 = arith.constant 0 : i32
    return %c0_i32, %c0_i32_0 : i32, i32
  }
  func.func @transform_4(%arg0: i32) -> (i32, i32, i32) {
    %c0_i32 = arith.constant 0 : i32
    %c0_i32_0 = arith.constant 0 : i32
    %c0_i32_1 = arith.constant 0 : i32
    %c0_i32_2 = arith.constant 0 : i32
    return %c0_i32, %c0_i32_0, %c0_i32_1 : i32, i32, i32
  }
  func.func @transform_5(%arg0: i32) -> (i32, i32, i32) {
    %c0_i32 = arith.constant 0 : i32
    %c0_i32_0 = arith.constant 0 : i32
    %c0_i32_1 = arith.constant 0 : i32
    %c0_i32_2 = arith.constant 0 : i32
    return %c0_i32, %c0_i32_0, %c0_i32_1 : i32, i32, i32
  }
  func.func @transform_6(%arg0: i32) -> (i32, i32, i32, i32) {
    %c0_i32 = arith.constant 0 : i32
    %c0_i32_0 = arith.constant 0 : i32
    %c0_i32_1 = arith.constant 0 : i32
    %c0_i32_2 = arith.constant 0 : i32
    %c0_i32_3 = arith.constant 0 : i32
    return %c0_i32, %c0_i32_0, %c0_i32_1, %c0_i32_2 : i32, i32, i32, i32
  }
  func.func @transform_7(%arg0: i32) -> (i32, i32, i32) {
    %c0_i32 = arith.constant 0 : i32
    %c0_i32_0 = arith.constant 0 : i32
    %c0_i32_1 = arith.constant 0 : i32
    %c0_i32_2 = arith.constant 0 : i32
    return %c0_i32, %c0_i32_0, %c0_i32_1 : i32, i32, i32
  }
  func.func @transform_8(%arg0: i32) -> (i32, i32, i32) {
    %c0_i32 = arith.constant 0 : i32
    %c0_i32_0 = arith.constant 0 : i32
    %c0_i32_1 = arith.constant 0 : i32
    %c0_i32_2 = arith.constant 0 : i32
    return %c0_i32, %c0_i32_0, %c0_i32_1 : i32, i32, i32
  }
  func.func @transform_9(%arg0: i32) -> (i32, i32) {
    %c0_i32 = arith.constant 0 : i32
    %c0_i32_0 = arith.constant 0 : i32
    %c0_i32_1 = arith.constant 0 : i32
    return %c0_i32, %c0_i32_0 : i32, i32
  }
  func.func @transform_10(%arg0: i32) -> (i32, i32) {
    %c0_i32 = arith.constant 0 : i32
    %c0_i32_0 = arith.constant 0 : i32
    %c0_i32_1 = arith.constant 0 : i32
    return %c0_i32, %c0_i32_0 : i32, i32
  }
  func.func @transform_11(%arg0: i32) -> (i32, i32, i32) {
    %c0_i32 = arith.constant 0 : i32
    %c0_i32_0 = arith.constant 0 : i32
    %c0_i32_1 = arith.constant 0 : i32
    return %arg0, %c0_i32, %c0_i32_0 : i32, i32, i32
  }
}

</mosaic_0001>

<llo_original>
// kernel: encoder_forward.1
$region0: #{encoder_forward.1}
  #allocation0 [shape = 'u32[]', space=smem, size = 0x4, offset = 0x4, fixed_abs, tag = 'smem constant byte address 0x4 - core index']
  #allocation1 [shape = 'u32[72,128]{1,0:T(1,128)}', space=vmem, size = 0x9000, scoped, tag = 'internal scratch']
  %s0 = inlined_call_operand.vmem [shape: f32[2,8,32], index: 0, kind: input, shape index: {}]
  %s1 = inlined_call_operand.vmem [shape: f32[2,1,8], index: 1, kind: input, shape index: {}]
  %s2 = inlined_call_operand.vmem [shape: f32[1,32], index: 2, kind: input, shape index: {}]
  %s3 = inlined_call_operand.vmem [shape: f32[1,32], index: 3, kind: input, shape index: {}]
  %s4 = inlined_call_operand.vmem [shape: bf16[2,32,96], index: 4, kind: input, shape index: {}]
  %s5 = inlined_call_operand.vmem [shape: f32[2,8,96], index: 5, kind: input, shape index: {}]
  %s6 = inlined_call_operand.vmem [shape: bf16[2,2,16,32], index: 6, kind: input, shape index: {}]
  %s7 = inlined_call_operand.vmem [shape: bf16[2,32,64], index: 7, kind: input, shape index: {}]
  %s8 = inlined_call_operand.vmem [shape: bf16[2,64,32], index: 8, kind: input, shape index: {}]
  %s9 = inlined_call_operand.vmem [shape: bf16[32,32], index: 9, kind: input, shape index: {}]
  %s10 = inlined_call_operand.vmem [shape: f32[1,32], index: 10, kind: input, shape index: {}]
  %s11 = inlined_call_operand.hbm [shape: f32[2,1,32], index: 11, kind: output, shape index: {}]
  %s12 = sld [smem:[#allocation0]]
  $region77: #{encoder_forward.1} parent=0
    _
  %s14 = ssub.s32 1, %s12
  %s15 = scalar_select 0, %s14, %s12
  $region1: #{encoder_forward.1} parent=0
    #allocation2 [shape = 'u8[1024]{0}', space=vmem, size = 0x400, scoped, tag = 'output window, operand 0']
    #allocation3 [shape = 's32[2]{0}', space=sflag, size = 0x8, scoped, tag = 'scoped memory for encoder_forward.1']
    %16 = vsyncpa [#allocation3], 0
    %s17 = scalar_lea.sflag [#allocation3], 1
    %18 = vsyncpa %s17, 0
    loop: start=0, step=1, limit=4
    $region2: #{encoder_forward.1} parent=1 // loop_pre_header
      _
    $region3: #{encoder_forward.1} parent=1 // loop_header
      %s20 = sphi 0, %s24
      %p21 = scmp.ge.s32.totalorder %s20, 4
      %s30 = sphi 0, %s32
      %s33 = sphi 0, %s30
      %s34 = sphi 0, %s33
      %s50 = sphi 0, %s34
      %s56 = sphi 0, %s58
      %s59 = sphi 0, %s56
      %s60 = sphi 0, %s59
      %s76 = sphi 0, %s60
      %s80 = sphi 0, %s80
      %s82 = sphi 0, %s80
      %s83 = sphi 0, %s82
      %s97 = sphi 0, %s83
      %s101 = sphi 0, %s101
      %s103 = sphi 0, %s101
      %s104 = sphi 0, %s103
      %s118 = sphi 0, %s104
      %s122 = sphi 0, %s122
      %s124 = sphi 0, %s122
      %s125 = sphi 0, %s124
      %s139 = sphi 0, %s125
      %s143 = sphi 0, %s143
      %s145 = sphi 0, %s143
      %s146 = sphi 0, %s145
      %s160 = sphi 0, %s146
      %s164 = sphi 0, %s164
      %s166 = sphi 0, %s164
      %s167 = sphi 0, %s166
      %s181 = sphi 0, %s167
      %s185 = sphi 0, %s185
      %s187 = sphi 0, %s185
      %s188 = sphi 0, %s187
      %s202 = sphi 0, %s188
      %s206 = sphi 0, %s206
      %s208 = sphi 0, %s206
      %s209 = sphi 0, %s208
      %s223 = sphi 0, %s209
      %s227 = sphi 0, %s227
      %s229 = sphi 0, %s227
      %s230 = sphi 0, %s229
      %s244 = sphi 0, %s230
      %s248 = sphi 0, %s248
      %s250 = sphi 0, %s248
      %s251 = sphi 0, %s250
      %s265 = sphi 0, %s251
      %s271 = sphi 0, %s273
      %s274 = sphi 0, %s271
      %s275 = sphi 0, %s274
      %s291 = sphi 0, %s275
    $region4: #{encoder_forward.1} parent=1 // loop_header_branch
      %23 = sbr.rel (%p21) target = $region8
    $region5: #{encoder_forward.1} parent=1 // loop_body
      %s25 = ssub.s32 %s20, 1
      %s26 = ssub.s32 %s20, 2
      %s27 = sadd.s32 %s20, 1
      %s28 = ssub.s32 %s20, %s27
      %p29 = scmp.eq.s32.totalorder %s28, 0
      %s31 = sadd.s32 %s30, 1
      %s32 = scalar_select %p29, %s30, %s31
      %p35 = pneg %p29
      %p36 = scmp.eq.s32.totalorder %s20, 1
      %p37 = por %p35, %p36
      %p38 = scmp.ne.s32.totalorder %s30, %s33
      %p39 = scmp.eq.s32.totalorder %s20, 0
      %p40 = por %p38, %p39
      %p41 = scmp.ne.s32.totalorder %s30, %s33
      %p42 = scmp.eq.s32.totalorder %s25, 1
      %p43 = por %p41, %p42
      %p44 = scmp.ne.s32.totalorder %s33, %s34
      %p45 = scmp.eq.s32.totalorder %s25, 0
      %p46 = por %p44, %p45
      %p47 = scmp.ne.s32.totalorder %s33, %s34
      %p48 = scmp.eq.s32.totalorder %s26, 1
      %p49 = por %p47, %p48
      %p51 = scmp.ne.s32.totalorder %s34, %s50
      %p52 = scmp.eq.s32.totalorder %s26, 0
      %p53 = por %p51, %p52
      %s54 = ssub.s32 %s20, %s27
      %p55 = scmp.eq.s32.totalorder %s54, 0
      %s57 = sadd.s32 %s56, 1
      %s58 = scalar_select %p55, %s56, %s57
      %p61 = pneg %p55
      %p62 = scmp.eq.s32.totalorder %s20, 1
      %p63 = por %p61, %p62
      %p64 = scmp.ne.s32.totalorder %s56, %s59
      %p65 = scmp.eq.s32.totalorder %s20, 0
      %p66 = por %p64, %p65
      %p67 = scmp.ne.s32.totalorder %s56, %s59
      %p68 = scmp.eq.s32.totalorder %s25, 1
      %p69 = por %p67, %p68
      %p70 = scmp.ne.s32.totalorder %s59, %s60
      %p71 = scmp.eq.s32.totalorder %s25, 0
      %p72 = por %p70, %p71
      %p73 = scmp.ne.s32.totalorder %s59, %s60
      %p74 = scmp.eq.s32.totalorder %s26, 1
      %p75 = por %p73, %p74
      %p77 = scmp.ne.s32.totalorder %s60, %s76
      %p78 = scmp.eq.s32.totalorder %s26, 0
      %p79 = por %p77, %p78
      %s81 = sadd.s32 %s80, 1
      %p84 = scmp.eq.s32.totalorder %s20, 1
      %p85 = scmp.ne.s32.totalorder %s80, %s82
      %p86 = scmp.eq.s32.totalorder %s20, 0
      %p87 = por %p85, %p86
      %p88 = scmp.ne.s32.totalorder %s80, %s82
      %p89 = scmp.eq.s32.totalorder %s25, 1
      %p90 = por %p88, %p89
      %p91 = scmp.ne.s32.totalorder %s82, %s83
      %p92 = scmp.eq.s32.totalorder %s25, 0
      %p93 = por %p91, %p92
      %p94 = scmp.ne.s32.totalorder %s82, %s83
      %p95 = scmp.eq.s32.totalorder %s26, 1
      %p96 = por %p94, %p95
      %p98 = scmp.ne.s32.totalorder %s83, %s97
      %p99 = scmp.eq.s32.totalorder %s26, 0
      %p100 = por %p98, %p99
      %s102 = sadd.s32 %s101, 1
      %p105 = scmp.eq.s32.totalorder %s20, 1
      %p106 = scmp.ne.s32.totalorder %s101, %s103
      %p107 = scmp.eq.s32.totalorder %s20, 0
      %p108 = por %p106, %p107
      %p109 = scmp.ne.s32.totalorder %s101, %s103
      %p110 = scmp.eq.s32.totalorder %s25, 1
      %p111 = por %p109, %p110
      %p112 = scmp.ne.s32.totalorder %s103, %s104
      %p113 = scmp.eq.s32.totalorder %s25, 0
      %p114 = por %p112, %p113
      %p115 = scmp.ne.s32.totalorder %s103, %s104
      %p116 = scmp.eq.s32.totalorder %s26, 1
      %p117 = por %p115, %p116
      %p119 = scmp.ne.s32.totalorder %s104, %s118
      %p120 = scmp.eq.s32.totalorder %s26, 0
      %p121 = por %p119, %p120
      %s123 = sadd.s32 %s122, 1
      %p126 = scmp.eq.s32.totalorder %s20, 1
      %p127 = scmp.ne.s32.totalorder %s122, %s124
      %p128 = scmp.eq.s32.totalorder %s20, 0
      %p129 = por %p127, %p128
      %p130 = scmp.ne.s32.totalorder %s122, %s124
      %p131 = scmp.eq.s32.totalorder %s25, 1
      %p132 = por %p130, %p131
      %p133 = scmp.ne.s32.totalorder %s124, %s125
      %p134 = scmp.eq.s32.totalorder %s25, 0
      %p135 = por %p133, %p134
      %p136 = scmp.ne.s32.totalorder %s124, %s125
      %p137 = scmp.eq.s32.totalorder %s26, 1
      %p138 = por %p136, %p137
      %p140 = scmp.ne.s32.totalorder %s125, %s139
      %p141 = scmp.eq.s32.totalorder %s26, 0
      %p142 = por %p140, %p141
      %s144 = sadd.s32 %s143, 1
      %p147 = scmp.eq.s32.totalorder %s20, 1
      %p148 = scmp.ne.s32.totalorder %s143, %s145
      %p149 = scmp.eq.s32.totalorder %s20, 0
      %p150 = por %p148, %p149
      %p151 = scmp.ne.s32.totalorder %s143, %s145
      %p152 = scmp.eq.s32.totalorder %s25, 1
      %p153 = por %p151, %p152
      %p154 = scmp.ne.s32.totalorder %s145, %s146
      %p155 = scmp.eq.s32.totalorder %s25, 0
      %p156 = por %p154, %p155
      %p157 = scmp.ne.s32.totalorder %s145, %s146
      %p158 = scmp.eq.s32.totalorder %s26, 1
      %p159 = por %p157, %p158
      %p161 = scmp.ne.s32.totalorder %s146, %s160
      %p162 = scmp.eq.s32.totalorder %s26, 0
      %p163 = por %p161, %p162
      %s165 = sadd.s32 %s164, 1
      %p168 = scmp.eq.s32.totalorder %s20, 1
      %p169 = scmp.ne.s32.totalorder %s164, %s166
      %p170 = scmp.eq.s32.totalorder %s20, 0
      %p171 = por %p169, %p170
      %p172 = scmp.ne.s32.totalorder %s164, %s166
      %p173 = scmp.eq.s32.totalorder %s25, 1
      %p174 = por %p172, %p173
      %p175 = scmp.ne.s32.totalorder %s166, %s167
      %p176 = scmp.eq.s32.totalorder %s25, 0
      %p177 = por %p175, %p176
      %p178 = scmp.ne.s32.totalorder %s166, %s167
      %p179 = scmp.eq.s32.totalorder %s26, 1
      %p180 = por %p178, %p179
      %p182 = scmp.ne.s32.totalorder %s167, %s181
      %p183 = scmp.eq.s32.totalorder %s26, 0
      %p184 = por %p182, %p183
      %s186 = sadd.s32 %s185, 1
      %p189 = scmp.eq.s32.totalorder %s20, 1
      %p190 = scmp.ne.s32.totalorder %s185, %s187
      %p191 = scmp.eq.s32.totalorder %s20, 0
      %p192 = por %p190, %p191
      %p193 = scmp.ne.s32.totalorder %s185, %s187
      %p194 = scmp.eq.s32.totalorder %s25, 1
      %p195 = por %p193, %p194
      %p196 = scmp.ne.s32.totalorder %s187, %s188
      %p197 = scmp.eq.s32.totalorder %s25, 0
      %p198 = por %p196, %p197
      %p199 = scmp.ne.s32.totalorder %s187, %s188
      %p200 = scmp.eq.s32.totalorder %s26, 1
      %p201 = por %p199, %p200
      %p203 = scmp.ne.s32.totalorder %s188, %s202
      %p204 = scmp.eq.s32.totalorder %s26, 0
      %p205 = por %p203, %p204
      %s207 = sadd.s32 %s206, 1
      %p210 = scmp.eq.s32.totalorder %s20, 1
      %p211 = scmp.ne.s32.totalorder %s206, %s208
      %p212 = scmp.eq.s32.totalorder %s20, 0
      %p213 = por %p211, %p212
      %p214 = scmp.ne.s32.totalorder %s206, %s208
      %p215 = scmp.eq.s32.totalorder %s25, 1
      %p216 = por %p214, %p215
      %p217 = scmp.ne.s32.totalorder %s208, %s209
      %p218 = scmp.eq.s32.totalorder %s25, 0
      %p219 = por %p217, %p218
      %p220 = scmp.ne.s32.totalorder %s208, %s209
      %p221 = scmp.eq.s32.totalorder %s26, 1
      %p222 = por %p220, %p221
      %p224 = scmp.ne.s32.totalorder %s209, %s223
      %p225 = scmp.eq.s32.totalorder %s26, 0
      %p226 = por %p224, %p225
      %s228 = sadd.s32 %s227, 1
      %p231 = scmp.eq.s32.totalorder %s20, 1
      %p232 = scmp.ne.s32.totalorder %s227, %s229
      %p233 = scmp.eq.s32.totalorder %s20, 0
      %p234 = por %p232, %p233
      %p235 = scmp.ne.s32.totalorder %s227, %s229
      %p236 = scmp.eq.s32.totalorder %s25, 1
      %p237 = por %p235, %p236
      %p238 = scmp.ne.s32.totalorder %s229, %s230
      %p239 = scmp.eq.s32.totalorder %s25, 0
      %p240 = por %p238, %p239
      %p241 = scmp.ne.s32.totalorder %s229, %s230
      %p242 = scmp.eq.s32.totalorder %s26, 1
      %p243 = por %p241, %p242
      %p245 = scmp.ne.s32.totalorder %s230, %s244
      %p246 = scmp.eq.s32.totalorder %s26, 0
      %p247 = por %p245, %p246
      %s249 = sadd.s32 %s248, 1
      %p252 = scmp.eq.s32.totalorder %s20, 1
      %p253 = scmp.ne.s32.totalorder %s248, %s250
      %p254 = scmp.eq.s32.totalorder %s20, 0
      %p255 = por %p253, %p254
      %p256 = scmp.ne.s32.totalorder %s248, %s250
      %p257 = scmp.eq.s32.totalorder %s25, 1
      %p258 = por %p256, %p257
      %p259 = scmp.ne.s32.totalorder %s250, %s251
      %p260 = scmp.eq.s32.totalorder %s25, 0
      %p261 = por %p259, %p260
      %p262 = scmp.ne.s32.totalorder %s250, %s251
      %p263 = scmp.eq.s32.totalorder %s26, 1
      %p264 = por %p262, %p263
      %p266 = scmp.ne.s32.totalorder %s251, %s265
      %p267 = scmp.eq.s32.totalorder %s26, 0
      %p268 = por %p266, %p267
      %s269 = ssub.s32 %s20, %s27
      %p270 = scmp.eq.s32.totalorder %s269, 0
      %s272 = sadd.s32 %s271, 1
      %s273 = scalar_select %p270, %s271, %s272
      %p276 = pneg %p270
      %p277 = scmp.eq.s32.totalorder %s20, 1
      %p278 = por %p276, %p277
      %p279 = scmp.ne.s32.totalorder %s271, %s274
      %p280 = scmp.eq.s32.totalorder %s20, 0
      %p281 = por %p279, %p280
      %p282 = scmp.ne.s32.totalorder %s271, %s274
      %p283 = scmp.eq.s32.totalorder %s25, 1
      %p284 = por %p282, %p283
      %p285 = scmp.ne.s32.totalorder %s274, %s275
      %p286 = scmp.eq.s32.totalorder %s25, 0
      %p287 = por %p285, %p286
      %p288 = scmp.ne.s32.totalorder %s274, %s275
      %p289 = scmp.eq.s32.totalorder %s26, 1
      %p290 = por %p288, %p289
      %p292 = scmp.ne.s32.totalorder %s275, %s291
      %p293 = scmp.eq.s32.totalorder %s26, 0
      %p294 = por %p292, %p293
      %p295 = scmp.le.s32.totalorder 1, %s20
      %p296 = scmp.lt.s32.totalorder %s20, 3
      %p297 = pnand %p295, %p296
      %p298 = pneg %p297
      // Predicated region
      $region9: #{encoder_forward.1} parent=5 // pred_check
        _
      $region10: #{encoder_forward.1} parent=5 // pred_check_branch
        %300 = sbr.rel (%p297) target = $region12
      $region11: #{encoder_forward.1} parent=5 // pred_region
        %s301 = ssub.s32 %s20, 1
        // Predicated region
        $region13: #{encoder_forward.1} parent=11 // pred_check
          %p302 = pneg %p93
        $region14: #{encoder_forward.1} parent=11 // pred_check_branch
          %304 = sbr.rel (%p302) target = $region16
        $region15: #{encoder_forward.1} parent=11 // pred_region
          _
        $region16: #{encoder_forward.1} parent=11 // pred_fallthru
          _
        // Predicated region
        $region17: #{encoder_forward.1} parent=11 // pred_check
          %p305 = pneg %p114
        $region18: #{encoder_forward.1} parent=11 // pred_check_branch
          %307 = sbr.rel (%p305) target = $region20
        $region19: #{encoder_forward.1} parent=11 // pred_region
          _
        $region20: #{encoder_forward.1} parent=11 // pred_fallthru
          _
        // Predicated region
        $region21: #{encoder_forward.1} parent=11 // pred_check
          %p308 = pneg %p135
        $region22: #{encoder_forward.1} parent=11 // pred_check_branch
          %310 = sbr.rel (%p308) target = $region24
        $region23: #{encoder_forward.1} parent=11 // pred_region
          _
        $region24: #{encoder_forward.1} parent=11 // pred_fallthru
          _
        // Predicated region
        $region25: #{encoder_forward.1} parent=11 // pred_check
          %p311 = pneg %p156
        $region26: #{encoder_forward.1} parent=11 // pred_check_branch
          %313 = sbr.rel (%p311) target = $region28
        $region27: #{encoder_forward.1} parent=11 // pred_region
          _
        $region28: #{encoder_forward.1} parent=11 // pred_fallthru
          _
        // Predicated region
        $region29: #{encoder_forward.1} parent=11 // pred_check
          %p314 = pneg %p177
        $region30: #{encoder_forward.1} parent=11 // pred_check_branch
          %316 = sbr.rel (%p314) target = $region32
        $region31: #{encoder_forward.1} parent=11 // pred_region
          _
        $region32: #{encoder_forward.1} parent=11 // pred_fallthru
          _
        // Predicated region
        $region33: #{encoder_forward.1} parent=11 // pred_check
          %p317 = pneg %p198
        $region34: #{encoder_forward.1} parent=11 // pred_check_branch
          %319 = sbr.rel (%p317) target = $region36
        $region35: #{encoder_forward.1} parent=11 // pred_region
          _
        $region36: #{encoder_forward.1} parent=11 // pred_fallthru
          _
        // Predicated region
        $region37: #{encoder_forward.1} parent=11 // pred_check
          %p320 = pneg %p219
        $region38: #{encoder_forward.1} parent=11 // pred_check_branch
          %322 = sbr.rel (%p320) target = $region40
        $region39: #{encoder_forward.1} parent=11 // pred_region
          _
        $region40: #{encoder_forward.1} parent=11 // pred_fallthru
          _
        // Predicated region
        $region41: #{encoder_forward.1} parent=11 // pred_check
          %p323 = pneg %p240
        $region42: #{encoder_forward.1} parent=11 // pred_check_branch
          %325 = sbr.rel (%p323) target = $region44
        $region43: #{encoder_forward.1} parent=11 // pred_region
          _
        $region44: #{encoder_forward.1} parent=11 // pred_fallthru
          _
        // Predicated region
        $region45: #{encoder_forward.1} parent=11 // pred_check
          %p326 = pneg %p261
        $region46: #{encoder_forward.1} parent=11 // pred_check_branch
          %328 = sbr.rel (%p326) target = $region48
        $region47: #{encoder_forward.1} parent=11 // pred_region
          _
        $region48: #{encoder_forward.1} parent=11 // pred_fallthru
          _
      $region12: #{encoder_forward.1} parent=5 // pred_fallthru
        _
      %p329 = scmp.lt.s32.totalorder %s20, 2
      // Predicated region
      $region49: #{encoder_forward.1} parent=5 // pred_check
        %p330 = pneg %p329
      $region50: #{encoder_forward.1} parent=5 // pred_check_branch
        %332 = sbr.rel (%p330) target = $region52
      $region51: #{encoder_forward.1} parent=5 // pred_region
        // Predicated region
        $region53: #{encoder_forward.1} parent=51 // pred_check
          %p333 = pneg %p40
        $region54: #{encoder_forward.1} parent=51 // pred_check_branch
          %335 = sbr.rel (%p333) target = $region56
        $region55: #{encoder_forward.1} parent=51 // pred_region
          %p336 = scmp.lt.s32.totalorder %s20, 1
          %s337 = scalar_select %p336, %s20, 1
          %s338 = smul.addr %s337, 8
          %s339 = scalar_lea.vmem %s0, %s338
        $region56: #{encoder_forward.1} parent=51 // pred_fallthru
          _
        // Predicated region
        $region57: #{encoder_forward.1} parent=51 // pred_check
          %p340 = pneg %p66
        $region58: #{encoder_forward.1} parent=51 // pred_check_branch
          %342 = sbr.rel (%p340) target = $region60
        $region59: #{encoder_forward.1} parent=51 // pred_region
          %p343 = scmp.lt.s32.totalorder %s20, 1
          %s344 = scalar_select %p343, %s20, 1
          %s345 = scalar_lea.vmem %s1, %s344
        $region60: #{encoder_forward.1} parent=51 // pred_fallthru
          _
      $region52: #{encoder_forward.1} parent=5 // pred_fallthru
        _
      %p346 = scmp.le.s32.totalorder 1, %s20
      %p347 = scmp.lt.s32.totalorder %s20, 3
      %p348 = pnand %p346, %p347
      %p349 = pneg %p348
      // Predicated region
      $region61: #{encoder_forward.1} parent=5 // pred_check
        _
      $region62: #{encoder_forward.1} parent=5 // pred_check_branch
        %351 = sbr.rel (%p348) target = $region64
      $region63: #{encoder_forward.1} parent=5 // pred_region
        %s352 = ssub.s32 %s20, 1
        %p353 = scmp.lt.s32.totalorder %s25, 1
        %s354 = scalar_select %p353, %s25, 1
        %s355 = smul.addr %s354, 8
        %s356 = scalar_lea.vmem %s0, %s355
        %p357 = pneg %p46
        %p358 = pneg %p43
        %p359 = scmp.lt.s32.totalorder %s25, 1
        %s360 = scalar_select %p359, %s25, 1
        %s361 = scalar_lea.vmem %s1, %s360
        %p362 = pneg %p72
        %p363 = pneg %p69
        %p364 = pneg %p93
        %p365 = pneg %p90
        %p366 = pneg %p114
        %p367 = pneg %p111
        %p368 = pneg %p135
        %p369 = pneg %p132
        %p370 = pneg %p156
        %p371 = pneg %p153
        %p372 = pneg %p177
        %p373 = pneg %p174
        %p374 = pneg %p198
        %p375 = pneg %p195
        %p376 = pneg %p219
        %p377 = pneg %p216
        %p378 = pneg %p240
        %p379 = pneg %p237
        %p380 = pneg %p261
        %p381 = pneg %p258
        %p382 = pneg %p287
        %p383 = pneg %p284
        %s384 = sand.u32 %s274, 1
        %s385 = scalar_lea.sflag [#allocation3], %s384
        %s386 = sand.u32 %s274, 1
        %s387 = scalar_lea.vmem [#allocation2], %s386
        %p388 = scmp.lt.s32.totalorder %s25, 1
        %s389 = scalar_select %p388, %s25, 1
        %s390 = smul.addr %s389, 8
        %s391 = scalar_lea.vmem %s0, %s390
        %p392 = scmp.lt.s32.totalorder %s25, 1
        %s393 = scalar_select %p392, %s25, 1
        %s394 = scalar_lea.vmem %s1, %s393
        %v396 = vld [vmem:[%s391] sm:$0xff]
        %v397 = vld [vmem:[%s2] sm:$0x1]
        %v398 = vld [vmem:[%s3] sm:$0x1]
        %vm399 = vcmask 261120
        %v400 = vsel %vm399, %v396, 0.0
        %401 = vadd.xlane.f32.xlu0 %v400
        %v402 = vpop.xlane.xlu0 %401
        %v403 = vrcp.pop 32.0
        %v404 = vmul.f32 32.0, %v403
        %v405 = vsub.f32 1.0, %v404
        %v406 = vmul.f32 %v403, %v405
        %v407 = vadd.f32 %v403, %v406
        %vm408 = vweird.f32 %v403
        %v409 = vsel %vm408, %v403, %v407
        %v410 = vmul.f32 %v402, %v409
        %v411 = vsub.f32 %v396, %v410
        %v412 = vmul.f32 %v411, %v411
        %v413 = vsel %vm399, %v412, 0.0
        %414 = vadd.xlane.f32.xlu0 %v413
        %v415 = vpop.xlane.xlu0 %414
        %v416 = vmul.f32 %v415, %v409
        %v417 = vadd.f32 %v416, 1e-12
        %v418 = vrsqrt.pop %v417
        %v419 = vmul.f32 %v418, %v417
        %v420 = vmul.f32 %v419, %v418
        %v421 = vmul.f32 0.5, %v420
        %v422 = vsub.f32 1.5, %v421
        %v423 = vmul.f32 %v418, %v422
        %vm424 = vweird.f32 %v417
        %vm425 = vweird.f32 %v418
        %vm426 = vmor %vm424, %vm425
        %v427 = vsel %vm426, %v418, %v423
        %v428 = vmul.f32 %v411, %v427
        %v430 = vperm.slane %v397, 0
        %v432 = vmul.f32 %v428, %v430
        %v434 = vperm.slane %v398, 0
        %v436 = vadd.f32 %v432, %v434
        %v437 = vld [vmem:[%s394] sm:$0x1]
        %v438 = vld [vmem:[%s5] sm:$0x1]
        %v439 = vld [vmem:[%s5 + $0x1] sm:$0x1]
        %v440 = vld [vmem:[%s5 + $0x2] sm:$0x1]
        %v441 = vld [vmem:[%s5 + $0x3] sm:$0x1]
        %v442 = vld [vmem:[%s5 + $0x4] sm:$0x1]
        %v443 = vld [vmem:[%s5 + $0x5] sm:$0x1]
        %v444 = vld [vmem:[%s5 + $0x6] sm:$0x1]
        %v445 = vld [vmem:[%s5 + $0x7] sm:$0x1]
        %v446 = vpack.c.bf16 %v436, %v436
        %v447 = vld [vmem:[%s4] sm:$0xf]
        %v448 = vld [vmem:[%s4 + $0x4] sm:$0xf]
        %v449 = vld [vmem:[%s4 + $0x8] sm:$0xf]
        %v450 = vld [vmem:[%s4 + $0xc] sm:$0xf]
        %v451 = vperm.slane %v438, 0
        %v456 = vunpack.c.l.b16 %v447
        %v457 = vunpack.c.l.b16 %v448
        %v458 = vunpack.c.l.b16 %v449
        %v459 = vunpack.c.l.b16 %v450
        %v460 = vpack.c.b16 %v457, %v456
        %v461 = vpack.c.b16 %v459, %v458
        %v465 = vsel %vm399, %v446, 0
        %467 = vmatpush.bf16.msra.mxu0 0
        %468 = vmatpush.bf16.msra.mxu0 0
        %469 = vmatpush.bf16.msra.mxu0 0
        %470 = vmatpush.bf16.msra.mxu0 0
        %471 = vmatpush.bf16.msra.mxu0 0
        %472 = vmatpush.bf16.msra.mxu0 0
        %473 = vmatpush.bf16.msra.mxu0 %v461
        %474 = vmatpush.bf16.msra.mxu0 %v460
        %475 = vmatmul.bf16.gmra.mxu0 %v465
        %v476 = vpop.f32.mrf.mxu0
        %v477 = vadd.f32 %v451, %v476
        %v478 = vpop.f32.mrf.mxu0
        %479 = vdwg.mxu0
        %481 = vrot.lane.b32.xlu0 %v477, 112
        %v482 = vpop.permute.xlu0 %481
        %v484 = vpack.c.bf16 %v477, %v477
        %v485 = vpack.c.bf16 %v482, %v482
        %v487 = vunpack.c.l.b16 %v484
        %v488 = vpack.c.b16 %v487, %v487
        %489 = vrot.lane.b32.xlu0 %v488, 96
        %v490 = vpop.permute.xlu0 %489
        %vm491 = vcmask 130048
        %v493 = vsel %vm491, %v484, 0
        %v496 = vsel %vm491, %v490, 0
        %498 = vmatpush.bf16.xpose.msra.mxu0 0
        %499 = vmatpush.bf16.xpose.msra.mxu0 0
        %500 = vmatpush.bf16.xpose.msra.mxu0 0
        %501 = vmatpush.bf16.xpose.msra.mxu0 0
        %502 = vmatpush.bf16.xpose.msra.mxu0 0
        %503 = vmatpush.bf16.xpose.msra.mxu0 0
        %504 = vmatpush.bf16.xpose.msra.mxu0 0
        %505 = vmatpush.bf16.xpose.msra.mxu0 %v496
        %506 = vmatmul.bf16.gmra.mxu0 %v493
        %v507 = vpop.f32.mrf.mxu0
        %v508 = vadd.f32 0.0, %v507
        %v509 = vpop.f32.mrf.mxu0
        %510 = vdwg.mxu0
        %v512 = vunpack.c.l.b16 %v485
        %v513 = vpack.c.b16 %v512, %v512
        %514 = vrot.lane.b32.xlu0 %v513, 96
        %v515 = vpop.permute.xlu0 %514
        %v517 = vsel %vm491, %v485, 0
        %v520 = vsel %vm491, %v515, 0
        %522 = vmatpush.bf16.xpose.msra.mxu0 0
        %523 = vmatpush.bf16.xpose.msra.mxu0 0
        %524 = vmatpush.bf16.xpose.msra.mxu0 0
        %525 = vmatpush.bf16.xpose.msra.mxu0 0
        %526 = vmatpush.bf16.xpose.msra.mxu0 0
        %527 = vmatpush.bf16.xpose.msra.mxu0 0
        %528 = vmatpush.bf16.xpose.msra.mxu0 0
        %529 = vmatpush.bf16.xpose.msra.mxu0 %v520
        %530 = vmatmul.bf16.gmra.mxu0 %v517
        %v531 = vpop.f32.mrf.mxu0
        %v532 = vadd.f32 0.0, %v531
        %v533 = vpop.f32.mrf.mxu0
        %534 = vdwg.mxu0
        %v535 = vmul.f32 %v508, 0.25
        %v536 = vmul.f32 %v532, 0.25
        %v538 = vperm.slane %v437, 0
        %v540 = vadd.f32 %v535, %v538
        %v541 = vadd.f32 %v536, %v538
        %vm542 = vcmask 64512
        %v543 = vsel %vm542, %v540, -inf
        %544 = vmax.xlane.f32.xlu0 %v543
        %v545 = vpop.xlane.xlu0 %544
        %v546 = vsel %vm542, %v541, -inf
        %547 = vmax.xlane.f32.xlu0 %v546
        %v548 = vpop.xlane.xlu0 %547
        %v549 = vsub.f32 %v540, %v545
        %v550 = vsub.f32 %v541, %v548
        %v551 = vmul.f32 %v549, 1.442695
        %v552 = vpow.pop %v551
        %v553 = vmul.f32 %v550, 1.442695
        %v554 = vpow.pop %v553
        %v555 = vsel %vm542, %v552, 0.0
        %556 = vadd.xlane.f32.xlu0 %v555
        %v557 = vpop.xlane.xlu0 %556
        %v558 = vsel %vm542, %v554, 0.0
        %559 = vadd.xlane.f32.xlu0 %v558
        %v560 = vpop.xlane.xlu0 %559
        %v561 = vrcp.pop %v557
        %v562 = vmul.f32 %v557, %v561
        %v563 = vsub.f32 1.0, %v562
        %v564 = vmul.f32 %v561, %v563
        %v565 = vadd.f32 %v561, %v564
        %vm566 = vweird.f32 %v557
        %vm567 = vweird.f32 %v561
        %vm568 = vmor %vm566, %vm567
        %v569 = vsel %vm568, %v561, %v565
        %v570 = vand.u32 2147483647, %v557
        %vm571 = vcmp.eq.f32.partialorder %v570, 8.507059e+37
        %v572 = vand.u32 %v557, 2147483648
        %v573 = vor.u32 1.1754944e-38, %v572
        %v574 = vsel %vm571, %v573, %v569
        %v575 = vmul.f32 %v552, %v574
        %v576 = vrcp.pop %v560
        %v577 = vmul.f32 %v560, %v576
        %v578 = vsub.f32 1.0, %v577
        %v579 = vmul.f32 %v576, %v578
        %v580 = vadd.f32 %v576, %v579
        %vm581 = vweird.f32 %v560
        %vm582 = vweird.f32 %v576
        %vm583 = vmor %vm581, %vm582
        %v584 = vsel %vm583, %v576, %v580
        %v585 = vand.u32 2147483647, %v560
        %vm586 = vcmp.eq.f32.partialorder %v585, 8.507059e+37
        %v587 = vand.u32 %v560, 2147483648
        %v588 = vor.u32 1.1754944e-38, %v587
        %v589 = vsel %vm586, %v588, %v584
        %v590 = vmul.f32 %v554, %v589
        %v591 = vpack.c.bf16 %v575, %v575
        %v592 = vpack.c.bf16 %v590, %v590
        %593 = vrot.lane.b32.xlu0 %v488, 64
        %v594 = vpop.permute.xlu0 %593
        %v596 = vsel %vm542, %v591, 0
        %vm598 = vcmask 1043456
        %v600 = vsel %vm598, %v594, 0
        %602 = vmatpush.bf16.msra.mxu0 0
        %603 = vmatpush.bf16.msra.mxu0 0
        %604 = vmatpush.bf16.msra.mxu0 0
        %605 = vmatpush.bf16.msra.mxu0 0
        %606 = vmatpush.bf16.msra.mxu0 0
        %607 = vmatpush.bf16.msra.mxu0 0
        %608 = vmatpush.bf16.msra.mxu0 0
        %609 = vmatpush.bf16.msra.mxu0 %v600
        %610 = vmatmul.bf16.gmra.mxu0 %v596
        %v611 = vpop.f32.mrf.mxu0
        %v612 = vadd.f32 0.0, %v611
        %v613 = vpop.f32.mrf.mxu0
        %614 = vdwg.mxu0
        %615 = vrot.lane.b32.xlu0 %v513, 64
        %v616 = vpop.permute.xlu0 %615
        %v618 = vsel %vm542, %v592, 0
        %v621 = vsel %vm598, %v616, 0
        %623 = vmatpush.bf16.msra.mxu0 0
        %624 = vmatpush.bf16.msra.mxu0 0
        %625 = vmatpush.bf16.msra.mxu0 0
        %626 = vmatpush.bf16.msra.mxu0 0
        %627 = vmatpush.bf16.msra.mxu0 0
        %628 = vmatpush.bf16.msra.mxu0 0
        %629 = vmatpush.bf16.msra.mxu0 0
        %630 = vmatpush.bf16.msra.mxu0 %v621
        %631 = vmatmul.bf16.gmra.mxu0 %v618
        %v632 = vpop.f32.mrf.mxu0
        %v633 = vadd.f32 0.0, %v632
        %v634 = vpop.f32.mrf.mxu0
        %635 = vdwg.mxu0
        %v636 = vpack.c.bf16 %v612, %v612
        %v637 = vpack.c.bf16 %v633, %v633
        %v638 = vld [vmem:[%s6] sm:$0xf]
        %v639 = vld [vmem:[%s6 + $0x4] sm:$0xf]
        %v640 = vld [vmem:[%s6 + $0x8] sm:$0xf]
        %v641 = vld [vmem:[%s6 + $0xc] sm:$0xf]
        %v644 = vunpack.c.l.b16 %v638
        %v645 = vunpack.c.l.b16 %v639
        %v646 = vpack.c.b16 %v645, %v644
        %v649 = vsel %vm491, %v636, 0
        %651 = vmatpush.bf16.msra.mxu0 0
        %652 = vmatpush.bf16.msra.mxu0 0
        %653 = vmatpush.bf16.msra.mxu0 0
        %654 = vmatpush.bf16.msra.mxu0 0
        %655 = vmatpush.bf16.msra.mxu0 0
        %656 = vmatpush.bf16.msra.mxu0 0
        %657 = vmatpush.bf16.msra.mxu0 0
        %658 = vmatpush.bf16.msra.mxu0 %v646
        %659 = vmatmul.bf16.gmra.mxu0 %v649
        %v660 = vpop.f32.mrf.mxu0
        %v661 = vadd.f32 0.0, %v660
        %v662 = vpop.f32.mrf.mxu0
        %663 = vdwg.mxu0
        %v666 = vunpack.c.l.b16 %v640
        %v667 = vunpack.c.l.b16 %v641
        %v668 = vpack.c.b16 %v667, %v666
        %v671 = vsel %vm491, %v637, 0
        %673 = vmatpush.bf16.msra.mxu0 0
        %674 = vmatpush.bf16.msra.mxu0 0
        %675 = vmatpush.bf16.msra.mxu0 0
        %676 = vmatpush.bf16.msra.mxu0 0
        %677 = vmatpush.bf16.msra.mxu0 0
        %678 = vmatpush.bf16.msra.mxu0 0
        %679 = vmatpush.bf16.msra.mxu0 0
        %680 = vmatpush.bf16.msra.mxu0 %v668
        %681 = vmatmul.bf16.gmra.mxu0 %v671
        %v682 = vpop.f32.mrf.mxu0
        %v683 = vadd.f32 0.0, %v682
        %v684 = vpop.f32.mrf.mxu0
        %685 = vdwg.mxu0
        %v686 = vsel %vm399, %v661, 0.0
        %v687 = vsel %vm399, %v683, 0.0
        %v688 = vadd.f32 %v686, %v687
        %v689 = vperm.slane %v439, 0
        %v690 = vadd.f32 %v688, %v689
        %v691 = vadd.f32 %v690, %v436
        %v692 = vsel %vm399, %v691, 0.0
        %693 = vadd.xlane.f32.xlu0 %v692
        %v694 = vpop.xlane.xlu0 %693
        %v695 = vmul.f32 %v694, %v409
        %v696 = vsub.f32 %v691, %v695
        %v697 = vmul.f32 %v696, %v696
        %v698 = vsel %vm399, %v697, 0.0
        %699 = vadd.xlane.f32.xlu0 %v698
        %v700 = vpop.xlane.xlu0 %699
        %v701 = vmul.f32 %v700, %v409
        %v702 = vadd.f32 %v701, 1e-12
        %v703 = vrsqrt.pop %v702
        %v704 = vmul.f32 %v703, %v702
        %v705 = vmul.f32 %v704, %v703
        %v706 = vmul.f32 0.5, %v705
        %v707 = vsub.f32 1.5, %v706
        %v708 = vmul.f32 %v703, %v707
        %vm709 = vweird.f32 %v702
        %vm710 = vweird.f32 %v703
        %vm711 = vmor %vm709, %vm710
        %v712 = vsel %vm711, %v703, %v708
        %v713 = vmul.f32 %v696, %v712
        %v714 = vperm.slane %v440, 0
        %v715 = vmul.f32 %v713, %v714
        %v716 = vperm.slane %v441, 0
        %v717 = vadd.f32 %v715, %v716
        %v718 = vpack.c.bf16 %v717, %v717
        %v719 = vld [vmem:[%s7] sm:$0xf]
        %v720 = vld [vmem:[%s7 + $0x4] sm:$0xf]
        %v721 = vld [vmem:[%s7 + $0x8] sm:$0xf]
        %v722 = vld [vmem:[%s7 + $0xc] sm:$0xf]
        %v723 = vperm.slane %v442, 0
        %v728 = vunpack.c.l.b16 %v719
        %v729 = vunpack.c.l.b16 %v720
        %v730 = vunpack.c.l.b16 %v721
        %v731 = vunpack.c.l.b16 %v722
        %v732 = vpack.c.b16 %v729, %v728
        %v733 = vpack.c.b16 %v731, %v730
        %v737 = vsel %vm399, %v718, 0
        %739 = vmatpush.bf16.msra.mxu0 0
        %740 = vmatpush.bf16.msra.mxu0 0
        %741 = vmatpush.bf16.msra.mxu0 0
        %742 = vmatpush.bf16.msra.mxu0 0
        %743 = vmatpush.bf16.msra.mxu0 0
        %744 = vmatpush.bf16.msra.mxu0 0
        %745 = vmatpush.bf16.msra.mxu0 %v733
        %746 = vmatpush.bf16.msra.mxu0 %v732
        %747 = vmatmul.bf16.gmra.mxu0 %v737
        %v748 = vpop.f32.mrf.mxu0
        %v749 = vadd.f32 %v723, %v748
        %v750 = vpop.f32.mrf.mxu0
        %751 = vdwg.mxu0
        %v752 = vmul.f32 %v749, %v749
        %v753 = vmul.f32 %v749, %v752
        %v754 = vmul.f32 %v753, 0.044715
        %v755 = vadd.f32 %v749, %v754
        %v756 = vmul.f32 %v755, 0.7978846
        %v757 = vtanh.pop %v756
        %v758 = vadd.f32 %v757, 1.0
        %v759 = vmul.f32 %v758, 0.5
        %v760 = vmul.f32 %v749, %v759
        %v761 = vpack.c.bf16 %v760, %v760
        %v762 = vld [vmem:[%s8] sm:$0xf]
        %v763 = vld [vmem:[%s8 + $0x4] sm:$0xf]
        %v764 = vld [vmem:[%s8 + $0x8] sm:$0xf]
        %v765 = vld [vmem:[%s8 + $0xc] sm:$0xf]
        %v766 = vld [vmem:[%s8 + $0x10] sm:$0xf]
        %v767 = vld [vmem:[%s8 + $0x14] sm:$0xf]
        %v768 = vld [vmem:[%s8 + $0x18] sm:$0xf]
        %v769 = vld [vmem:[%s8 + $0x1c] sm:$0xf]
        %v770 = vperm.slane %v443, 0
        %v779 = vunpack.c.l.b16 %v762
        %v780 = vunpack.c.l.b16 %v763
        %v781 = vunpack.c.l.b16 %v764
        %v782 = vunpack.c.l.b16 %v765
        %v783 = vunpack.c.l.b16 %v766
        %v784 = vunpack.c.l.b16 %v767
        %v785 = vunpack.c.l.b16 %v768
        %v786 = vunpack.c.l.b16 %v769
        %v787 = vpack.c.b16 %v780, %v779
        %v788 = vpack.c.b16 %v782, %v781
        %v789 = vpack.c.b16 %v784, %v783
        %v790 = vpack.c.b16 %v786, %v785
        %vm795 = vcmask 523264
        %v797 = vsel %vm795, %v761, 0
        %799 = vmatpush.bf16.msra.mxu0 0
        %800 = vmatpush.bf16.msra.mxu0 0
        %801 = vmatpush.bf16.msra.mxu0 0
        %802 = vmatpush.bf16.msra.mxu0 0
        %803 = vmatpush.bf16.msra.mxu0 %v790
        %804 = vmatpush.bf16.msra.mxu0 %v789
        %805 = vmatpush.bf16.msra.mxu0 %v788
        %806 = vmatpush.bf16.msra.mxu0 %v787
        %807 = vmatmul.bf16.gmra.mxu0 %v797
        %v808 = vpop.f32.mrf.mxu0
        %v809 = vadd.f32 %v770, %v808
        %v810 = vpop.f32.mrf.mxu0
        %811 = vdwg.mxu0
        %v812 = vadd.f32 %v809, %v717
        %v813 = vsel %vm399, %v812, 0.0
        %814 = vadd.xlane.f32.xlu0 %v813
        %v815 = vpop.xlane.xlu0 %814
        %v816 = vmul.f32 %v815, %v409
        %v817 = vsub.f32 %v812, %v816
        %v818 = vmul.f32 %v817, %v817
        %v819 = vsel %vm399, %v818, 0.0
        %820 = vadd.xlane.f32.xlu0 %v819
        %v821 = vpop.xlane.xlu0 %820
        %v822 = vmul.f32 %v821, %v409
        %v823 = vadd.f32 %v822, 1e-12
        %v824 = vrsqrt.pop %v823
        %v825 = vmul.f32 %v824, %v823
        %v826 = vmul.f32 %v825, %v824
        %v827 = vmul.f32 0.5, %v826
        %v828 = vsub.f32 1.5, %v827
        %v829 = vmul.f32 %v824, %v828
        %vm830 = vweird.f32 %v823
        %vm831 = vweird.f32 %v824
        %vm832 = vmor %vm830, %vm831
        %v833 = vsel %vm832, %v824, %v829
        %v834 = vmul.f32 %v817, %v833
        %v835 = vperm.slane %v444, 0
        %v836 = vmul.f32 %v834, %v835
        %v837 = vperm.slane %v445, 0
        %v838 = vadd.f32 %v836, %v837
        %s839 = scalar_lea.vmem %s5, 8
        %v840 = vld [vmem:[%s839] sm:$0x1]
        %v841 = vld [vmem:[%s839 + $0x1] sm:$0x1]
        %v842 = vld [vmem:[%s839 + $0x2] sm:$0x1]
        %v843 = vld [vmem:[%s839 + $0x3] sm:$0x1]
        %v844 = vld [vmem:[%s839 + $0x4] sm:$0x1]
        %v845 = vld [vmem:[%s839 + $0x5] sm:$0x1]
        %v846 = vld [vmem:[%s839 + $0x6] sm:$0x1]
        %v847 = vld [vmem:[%s839 + $0x7] sm:$0x1]
        %v848 = vpack.c.bf16 %v838, %v838
        %s849 = scalar_lea.vmem %s4, 16
        %v850 = vld [vmem:[%s849] sm:$0xf]
        %v851 = vld [vmem:[%s849 + $0x4] sm:$0xf]
        %v852 = vld [vmem:[%s849 + $0x8] sm:$0xf]
        %v853 = vld [vmem:[%s849 + $0xc] sm:$0xf]
        %v854 = vperm.slane %v840, 0
        %v859 = vunpack.c.l.b16 %v850
        %v860 = vunpack.c.l.b16 %v851
        %v861 = vunpack.c.l.b16 %v852
        %v862 = vunpack.c.l.b16 %v853
        %v863 = vpack.c.b16 %v860, %v859
        %v864 = vpack.c.b16 %v862, %v861
        %v868 = vsel %vm399, %v848, 0
        %870 = vmatpush.bf16.msra.mxu0 0
        %871 = vmatpush.bf16.msra.mxu0 0
        %872 = vmatpush.bf16.msra.mxu0 0
        %873 = vmatpush.bf16.msra.mxu0 0
        %874 = vmatpush.bf16.msra.mxu0 0
        %875 = vmatpush.bf16.msra.mxu0 0
        %876 = vmatpush.bf16.msra.mxu0 %v864
        %877 = vmatpush.bf16.msra.mxu0 %v863
        %878 = vmatmul.bf16.gmra.mxu0 %v868
        %v879 = vpop.f32.mrf.mxu0
        %v880 = vadd.f32 %v854, %v879
        %v881 = vpop.f32.mrf.mxu0
        %882 = vdwg.mxu0
        %884 = vrot.lane.b32.xlu0 %v880, 112
        %v885 = vpop.permute.xlu0 %884
        %v887 = vpack.c.bf16 %v880, %v880
        %v888 = vpack.c.bf16 %v885, %v885
        %v890 = vunpack.c.l.b16 %v887
        %v891 = vpack.c.b16 %v890, %v890
        %892 = vrot.lane.b32.xlu0 %v891, 96
        %v893 = vpop.permute.xlu0 %892
        %v895 = vsel %vm491, %v887, 0
        %v898 = vsel %vm491, %v893, 0
        %900 = vmatpush.bf16.xpose.msra.mxu0 0
        %901 = vmatpush.bf16.xpose.msra.mxu0 0
        %902 = vmatpush.bf16.xpose.msra.mxu0 0
        %903 = vmatpush.bf16.xpose.msra.mxu0 0
        %904 = vmatpush.bf16.xpose.msra.mxu0 0
        %905 = vmatpush.bf16.xpose.msra.mxu0 0
        %906 = vmatpush.bf16.xpose.msra.mxu0 0
        %907 = vmatpush.bf16.xpose.msra.mxu0 %v898
        %908 = vmatmul.bf16.gmra.mxu0 %v895
        %v909 = vpop.f32.mrf.mxu0
        %v910 = vadd.f32 0.0, %v909
        %v911 = vpop.f32.mrf.mxu0
        %912 = vdwg.mxu0
        %v914 = vunpack.c.l.b16 %v888
        %v915 = vpack.c.b16 %v914, %v914
        %916 = vrot.lane.b32.xlu0 %v915, 96
        %v917 = vpop.permute.xlu0 %916
        %v919 = vsel %vm491, %v888, 0
        %v922 = vsel %vm491, %v917, 0
        %924 = vmatpush.bf16.xpose.msra.mxu0 0
        %925 = vmatpush.bf16.xpose.msra.mxu0 0
        %926 = vmatpush.bf16.xpose.msra.mxu0 0
        %927 = vmatpush.bf16.xpose.msra.mxu0 0
        %928 = vmatpush.bf16.xpose.msra.mxu0 0
        %929 = vmatpush.bf16.xpose.msra.mxu0 0
        %930 = vmatpush.bf16.xpose.msra.mxu0 0
        %931 = vmatpush.bf16.xpose.msra.mxu0 %v922
        %932 = vmatmul.bf16.gmra.mxu0 %v919
        %v933 = vpop.f32.mrf.mxu0
        %v934 = vadd.f32 0.0, %v933
        %v935 = vpop.f32.mrf.mxu0
        %936 = vdwg.mxu0
        %v937 = vmul.f32 %v910, 0.25
        %v938 = vmul.f32 %v934, 0.25
        %v939 = vadd.f32 %v937, %v538
        %v940 = vadd.f32 %v938, %v538
        %v941 = vsel %vm542, %v939, -inf
        %942 = vmax.xlane.f32.xlu0 %v941
        %v943 = vpop.xlane.xlu0 %942
        %v944 = vsel %vm542, %v940, -inf
        %945 = vmax.xlane.f32.xlu0 %v944
        %v946 = vpop.xlane.xlu0 %945
        %v947 = vsub.f32 %v939, %v943
        %v948 = vsub.f32 %v940, %v946
        %v949 = vmul.f32 %v947, 1.442695
        %v950 = vpow.pop %v949
        %v951 = vmul.f32 %v948, 1.442695
        %v952 = vpow.pop %v951
        %v953 = vsel %vm542, %v950, 0.0
        %954 = vadd.xlane.f32.xlu0 %v953
        %v955 = vpop.xlane.xlu0 %954
        %v956 = vsel %vm542, %v952, 0.0
        %957 = vadd.xlane.f32.xlu0 %v956
        %v958 = vpop.xlane.xlu0 %957
        %v959 = vrcp.pop %v955
        %v960 = vmul.f32 %v955, %v959
        %v961 = vsub.f32 1.0, %v960
        %v962 = vmul.f32 %v959, %v961
        %v963 = vadd.f32 %v959, %v962
        %vm964 = vweird.f32 %v955
        %vm965 = vweird.f32 %v959
        %vm966 = vmor %vm964, %vm965
        %v967 = vsel %vm966, %v959, %v963
        %v968 = vand.u32 2147483647, %v955
        %vm969 = vcmp.eq.f32.partialorder %v968, 8.507059e+37
        %v970 = vand.u32 %v955, 2147483648
        %v971 = vor.u32 1.1754944e-38, %v970
        %v972 = vsel %vm969, %v971, %v967
        %v973 = vmul.f32 %v950, %v972
        %v974 = vrcp.pop %v958
        %v975 = vmul.f32 %v958, %v974
        %v976 = vsub.f32 1.0, %v975
        %v977 = vmul.f32 %v974, %v976
        %v978 = vadd.f32 %v974, %v977
        %vm979 = vweird.f32 %v958
        %vm980 = vweird.f32 %v974
        %vm981 = vmor %vm979, %vm980
        %v982 = vsel %vm981, %v974, %v978
        %v983 = vand.u32 2147483647, %v958
        %vm984 = vcmp.eq.f32.partialorder %v983, 8.507059e+37
        %v985 = vand.u32 %v958, 2147483648
        %v986 = vor.u32 1.1754944e-38, %v985
        %v987 = vsel %vm984, %v986, %v982
        %v988 = vmul.f32 %v952, %v987
        %v989 = vpack.c.bf16 %v973, %v973
        %v990 = vpack.c.bf16 %v988, %v988
        %991 = vrot.lane.b32.xlu0 %v891, 64
        %v992 = vpop.permute.xlu0 %991
        %v994 = vsel %vm542, %v989, 0
        %v997 = vsel %vm598, %v992, 0
        %999 = vmatpush.bf16.msra.mxu0 0
        %1000 = vmatpush.bf16.msra.mxu0 0
        %1001 = vmatpush.bf16.msra.mxu0 0
        %1002 = vmatpush.bf16.msra.mxu0 0
        %1003 = vmatpush.bf16.msra.mxu0 0
        %1004 = vmatpush.bf16.msra.mxu0 0
        %1005 = vmatpush.bf16.msra.mxu0 0
        %1006 = vmatpush.bf16.msra.mxu0 %v997
        %1007 = vmatmul.bf16.gmra.mxu0 %v994
        %v1008 = vpop.f32.mrf.mxu0
        %v1009 = vadd.f32 0.0, %v1008
        %v1010 = vpop.f32.mrf.mxu0
        %1011 = vdwg.mxu0
        %1012 = vrot.lane.b32.xlu0 %v915, 64
        %v1013 = vpop.permute.xlu0 %1012
        %v1015 = vsel %vm542, %v990, 0
        %v1018 = vsel %vm598, %v1013, 0
        %1020 = vmatpush.bf16.msra.mxu0 0
        %1021 = vmatpush.bf16.msra.mxu0 0
        %1022 = vmatpush.bf16.msra.mxu0 0
        %1023 = vmatpush.bf16.msra.mxu0 0
        %1024 = vmatpush.bf16.msra.mxu0 0
        %1025 = vmatpush.bf16.msra.mxu0 0
        %1026 = vmatpush.bf16.msra.mxu0 0
        %1027 = vmatpush.bf16.msra.mxu0 %v1018
        %1028 = vmatmul.bf16.gmra.mxu0 %v1015
        %v1029 = vpop.f32.mrf.mxu0
        %v1030 = vadd.f32 0.0, %v1029
        %v1031 = vpop.f32.mrf.mxu0
        %1032 = vdwg.mxu0
        %v1033 = vpack.c.bf16 %v1009, %v1009
        %v1034 = vpack.c.bf16 %v1030, %v1030
        %s1035 = scalar_lea.vmem %s6, 16
        %v1036 = vld [vmem:[%s1035] sm:$0xf]
        %v1037 = vld [vmem:[%s1035 + $0x4] sm:$0xf]
        %v1038 = vld [vmem:[%s1035 + $0x8] sm:$0xf]
        %v1039 = vld [vmem:[%s1035 + $0xc] sm:$0xf]
        %v1042 = vunpack.c.l.b16 %v1036
        %v1043 = vunpack.c.l.b16 %v1037
        %v1044 = vpack.c.b16 %v1043, %v1042
        %v1047 = vsel %vm491, %v1033, 0
        %1049 = vmatpush.bf16.msra.mxu0 0
        %1050 = vmatpush.bf16.msra.mxu0 0
        %1051 = vmatpush.bf16.msra.mxu0 0
        %1052 = vmatpush.bf16.msra.mxu0 0
        %1053 = vmatpush.bf16.msra.mxu0 0
        %1054 = vmatpush.bf16.msra.mxu0 0
        %1055 = vmatpush.bf16.msra.mxu0 0
        %1056 = vmatpush.bf16.msra.mxu0 %v1044
        %1057 = vmatmul.bf16.gmra.mxu0 %v1047
        %v1058 = vpop.f32.mrf.mxu0
        %v1059 = vadd.f32 0.0, %v1058
        %v1060 = vpop.f32.mrf.mxu0
        %1061 = vdwg.mxu0
        %v1064 = vunpack.c.l.b16 %v1038
        %v1065 = vunpack.c.l.b16 %v1039
        %v1066 = vpack.c.b16 %v1065, %v1064
        %v1069 = vsel %vm491, %v1034, 0
        %1071 = vmatpush.bf16.msra.mxu0 0
        %1072 = vmatpush.bf16.msra.mxu0 0
        %1073 = vmatpush.bf16.msra.mxu0 0
        %1074 = vmatpush.bf16.msra.mxu0 0
        %1075 = vmatpush.bf16.msra.mxu0 0
        %1076 = vmatpush.bf16.msra.mxu0 0
        %1077 = vmatpush.bf16.msra.mxu0 0
        %1078 = vmatpush.bf16.msra.mxu0 %v1066
        %1079 = vmatmul.bf16.gmra.mxu0 %v1069
        %v1080 = vpop.f32.mrf.mxu0
        %v1081 = vadd.f32 0.0, %v1080
        %v1082 = vpop.f32.mrf.mxu0
        %1083 = vdwg.mxu0
        %v1084 = vsel %vm399, %v1059, 0.0
        %v1085 = vsel %vm399, %v1081, 0.0
        %v1086 = vadd.f32 %v1084, %v1085
        %v1087 = vperm.slane %v841, 0
        %v1088 = vadd.f32 %v1086, %v1087
        %v1089 = vadd.f32 %v1088, %v838
        %v1090 = vsel %vm399, %v1089, 0.0
        %1091 = vadd.xlane.f32.xlu0 %v1090
        %v1092 = vpop.xlane.xlu0 %1091
        %v1093 = vmul.f32 %v1092, %v409
        %v1094 = vsub.f32 %v1089, %v1093
        %v1095 = vmul.f32 %v1094, %v1094
        %v1096 = vsel %vm399, %v1095, 0.0
        %1097 = vadd.xlane.f32.xlu0 %v1096
        %v1098 = vpop.xlane.xlu0 %1097
        %v1099 = vmul.f32 %v1098, %v409
        %v1100 = vadd.f32 %v1099, 1e-12
        %v1101 = vrsqrt.pop %v1100
        %v1102 = vmul.f32 %v1101, %v1100
        %v1103 = vmul.f32 %v1102, %v1101
        %v1104 = vmul.f32 0.5, %v1103
        %v1105 = vsub.f32 1.5, %v1104
        %v1106 = vmul.f32 %v1101, %v1105
        %vm1107 = vweird.f32 %v1100
        %vm1108 = vweird.f32 %v1101
        %vm1109 = vmor %vm1107, %vm1108
        %v1110 = vsel %vm1109, %v1101, %v1106
        %v1111 = vmul.f32 %v1094, %v1110
        %v1112 = vperm.slane %v842, 0
        %v1113 = vmul.f32 %v1111, %v1112
        %v1114 = vperm.slane %v843, 0
        %v1115 = vadd.f32 %v1113, %v1114
        %v1116 = vpack.c.bf16 %v1115, %v1115
        %s1117 = scalar_lea.vmem %s7, 16
        %v1118 = vld [vmem:[%s1117] sm:$0xf]
        %v1119 = vld [vmem:[%s1117 + $0x4] sm:$0xf]
        %v1120 = vld [vmem:[%s1117 + $0x8] sm:$0xf]
        %v1121 = vld [vmem:[%s1117 + $0xc] sm:$0xf]
        %v1122 = vperm.slane %v844, 0
        %v1127 = vunpack.c.l.b16 %v1118
        %v1128 = vunpack.c.l.b16 %v1119
        %v1129 = vunpack.c.l.b16 %v1120
        %v1130 = vunpack.c.l.b16 %v1121
        %v1131 = vpack.c.b16 %v1128, %v1127
        %v1132 = vpack.c.b16 %v1130, %v1129
        %v1136 = vsel %vm399, %v1116, 0
        %1138 = vmatpush.bf16.msra.mxu0 0
        %1139 = vmatpush.bf16.msra.mxu0 0
        %1140 = vmatpush.bf16.msra.mxu0 0
        %1141 = vmatpush.bf16.msra.mxu0 0
        %1142 = vmatpush.bf16.msra.mxu0 0
        %1143 = vmatpush.bf16.msra.mxu0 0
        %1144 = vmatpush.bf16.msra.mxu0 %v1132
        %1145 = vmatpush.bf16.msra.mxu0 %v1131
        %1146 = vmatmul.bf16.gmra.mxu0 %v1136
        %v1147 = vpop.f32.mrf.mxu0
        %v1148 = vadd.f32 %v1122, %v1147
        %v1149 = vpop.f32.mrf.mxu0
        %1150 = vdwg.mxu0
        %v1151 = vmul.f32 %v1148, %v1148
        %v1152 = vmul.f32 %v1148, %v1151
        %v1153 = vmul.f32 %v1152, 0.044715
        %v1154 = vadd.f32 %v1148, %v1153
        %v1155 = vmul.f32 %v1154, 0.7978846
        %v1156 = vtanh.pop %v1155
        %v1157 = vadd.f32 %v1156, 1.0
        %v1158 = vmul.f32 %v1157, 0.5
        %v1159 = vmul.f32 %v1148, %v1158
        %v1160 = vpack.c.bf16 %v1159, %v1159
        %s1161 = scalar_lea.vmem %s8, 32
        %v1162 = vld [vmem:[%s1161] sm:$0xf]
        %v1163 = vld [vmem:[%s1161 + $0x4] sm:$0xf]
        %v1164 = vld [vmem:[%s1161 + $0x8] sm:$0xf]
        %v1165 = vld [vmem:[%s1161 + $0xc] sm:$0xf]
        %v1166 = vld [vmem:[%s1161 + $0x10] sm:$0xf]
        %v1167 = vld [vmem:[%s1161 + $0x14] sm:$0xf]
        %v1168 = vld [vmem:[%s1161 + $0x18] sm:$0xf]
        %v1169 = vld [vmem:[%s1161 + $0x1c] sm:$0xf]
        %v1170 = vperm.slane %v845, 0
        %v1179 = vunpack.c.l.b16 %v1162
        %v1180 = vunpack.c.l.b16 %v1163
        %v1181 = vunpack.c.l.b16 %v1164
        %v1182 = vunpack.c.l.b16 %v1165
        %v1183 = vunpack.c.l.b16 %v1166
        %v1184 = vunpack.c.l.b16 %v1167
        %v1185 = vunpack.c.l.b16 %v1168
        %v1186 = vunpack.c.l.b16 %v1169
        %v1187 = vpack.c.b16 %v1180, %v1179
        %v1188 = vpack.c.b16 %v1182, %v1181
        %v1189 = vpack.c.b16 %v1184, %v1183
        %v1190 = vpack.c.b16 %v1186, %v1185
        %v1196 = vsel %vm795, %v1160, 0
        %1198 = vmatpush.bf16.msra.mxu0 0
        %1199 = vmatpush.bf16.msra.mxu0 0
        %1200 = vmatpush.bf16.msra.mxu0 0
        %1201 = vmatpush.bf16.msra.mxu0 0
        %1202 = vmatpush.bf16.msra.mxu0 %v1190
        %1203 = vmatpush.bf16.msra.mxu0 %v1189
        %1204 = vmatpush.bf16.msra.mxu0 %v1188
        %1205 = vmatpush.bf16.msra.mxu0 %v1187
        %1206 = vmatmul.bf16.gmra.mxu0 %v1196
        %v1207 = vpop.f32.mrf.mxu0
        %v1208 = vadd.f32 %v1170, %v1207
        %v1209 = vpop.f32.mrf.mxu0
        %1210 = vdwg.mxu0
        %v1211 = vadd.f32 %v1208, %v1115
        %v1212 = vsel %vm399, %v1211, 0.0
        %1213 = vadd.xlane.f32.xlu0 %v1212
        %v1214 = vpop.xlane.xlu0 %1213
        %v1215 = vmul.f32 %v1214, %v409
        %v1216 = vsub.f32 %v1211, %v1215
        %v1217 = vmul.f32 %v1216, %v1216
        %v1218 = vsel %vm399, %v1217, 0.0
        %1219 = vadd.xlane.f32.xlu0 %v1218
        %v1220 = vpop.xlane.xlu0 %1219
        %v1221 = vmul.f32 %v1220, %v409
        %v1222 = vadd.f32 %v1221, 1e-12
        %v1223 = vrsqrt.pop %v1222
        %v1224 = vmul.f32 %v1223, %v1222
        %v1225 = vmul.f32 %v1224, %v1223
        %v1226 = vmul.f32 0.5, %v1225
        %v1227 = vsub.f32 1.5, %v1226
        %v1228 = vmul.f32 %v1223, %v1227
        %vm1229 = vweird.f32 %v1222
        %vm1230 = vweird.f32 %v1223
        %vm1231 = vmor %vm1229, %vm1230
        %v1232 = vsel %vm1231, %v1223, %v1228
        %v1233 = vmul.f32 %v1216, %v1232
        %v1234 = vperm.slane %v846, 0
        %v1235 = vmul.f32 %v1233, %v1234
        %v1236 = vperm.slane %v847, 0
        %v1237 = vadd.f32 %v1235, %v1236
        %v1238 = vpack.c.bf16 %v1237, %v1237
        %v1239 = vld [vmem:[%s9] sm:$0xf]
        %v1240 = vld [vmem:[%s9 + $0x4] sm:$0xf]
        %v1241 = vld [vmem:[%s9 + $0x8] sm:$0xf]
        %v1242 = vld [vmem:[%s9 + $0xc] sm:$0xf]
        %v1243 = vld [vmem:[%s10] sm:$0x1]
        %v1248 = vunpack.c.l.b16 %v1239
        %v1249 = vunpack.c.l.b16 %v1240
        %v1250 = vunpack.c.l.b16 %v1241
        %v1251 = vunpack.c.l.b16 %v1242
        %v1252 = vpack.c.b16 %v1249, %v1248
        %v1253 = vpack.c.b16 %v1251, %v1250
        %v1257 = vsel %vm399, %v1238, 0
        %1259 = vmatpush.bf16.msra.mxu0 0
        %1260 = vmatpush.bf16.msra.mxu0 0
        %1261 = vmatpush.bf16.msra.mxu0 0
        %1262 = vmatpush.bf16.msra.mxu0 0
        %1263 = vmatpush.bf16.msra.mxu0 0
        %1264 = vmatpush.bf16.msra.mxu0 0
        %1265 = vmatpush.bf16.msra.mxu0 %v1253
        %1266 = vmatpush.bf16.msra.mxu0 %v1252
        %1267 = vmatmul.bf16.gmra.mxu0 %v1257
        %v1268 = vpop.f32.mrf.mxu0
        %v1269 = vadd.f32 %v1243, %v1268
        %v1270 = vpop.f32.mrf.mxu0
        %1271 = vdwg.mxu0
        %v1272 = vtanh.pop %v1269
        %vm1273 = vcmask 253952
        %1274 = vst.msk [vmem:[%s387] sm:$0x1] %vm1273, %v1272
        %s1275 = sand.u32 %s274, 1
        %s1276 = scalar_lea.sflag [#allocation3], %s1275
        %s1277 = sand.u32 %s274, 1
        %s1278 = scalar_lea.vmem [#allocation2], %s1277
        // Predicated region
        $region65: #{encoder_forward.1} parent=63 // pred_check
          %p1279 = pneg %p284
        $region66: #{encoder_forward.1} parent=63 // pred_check_branch
          %1281 = sbr.rel (%p1279) target = $region68
        $region67: #{encoder_forward.1} parent=63 // pred_region
          %1283 = vsyncadd %s1276, 0
          %s1284 = scalar_lea.hbm %s11, %s25
          %s1286 = sshll.u32 %s1278, 4
          %s1287 = int_to_ptr.vmem [resolvable:$true] %s1286
          %s1288 = sshll.u32 %s1284, 4
          %s1289 = int_to_ptr.hbm [resolvable:$true] %s1288
          %1291 = dma.vmem_to_hbm [thread:$0]  %s1287, 16, %s1289, %s1276
        $region68: #{encoder_forward.1} parent=63 // pred_fallthru
          _
      $region64: #{encoder_forward.1} parent=5 // pred_fallthru
        _
      %p1292 = scmp.le.s32.totalorder 2, %s20
      // Predicated region
      $region69: #{encoder_forward.1} parent=5 // pred_check
        %p1293 = pneg %p1292
      $region70: #{encoder_forward.1} parent=5 // pred_check_branch
        %1295 = sbr.rel (%p1293) target = $region72
      $region71: #{encoder_forward.1} parent=5 // pred_region
        %s1296 = ssub.s32 %s20, 2
        // Predicated region
        $region73: #{encoder_forward.1} parent=71 // pred_check
          %p1297 = pneg %p290
        $region74: #{encoder_forward.1} parent=71 // pred_check_branch
          %1299 = sbr.rel (%p1297) target = $region76
        $region75: #{encoder_forward.1} parent=71 // pred_region
          %s1300 = sand.u32 %s275, 1
          %s1301 = scalar_lea.sflag [#allocation3], %s1300
          %s1302 = sand.u32 %s275, 1
          %s1303 = scalar_lea.vmem [#allocation2], %s1302
          %1305 = dma.done %s1301, 16
        $region76: #{encoder_forward.1} parent=71 // pred_fallthru
          _
      $region72: #{encoder_forward.1} parent=5 // pred_fallthru
        _
    $region6: #{encoder_forward.1} parent=1 // loop_footer
      %s24 = sadd.s32 1, %s20
    $region7: #{encoder_forward.1} parent=1 // loop_footer_branch
      %19 = sbr.rel target = $region3
    $region8: #{encoder_forward.1} parent=1 // loop_exit
      _
    %1306 = vsyncpa [#allocation3], 1
    %s1307 = scalar_lea.sflag [#allocation3], 1
    %1308 = vsyncpa %s1307, 1

</llo_original>
